<compile_context>
chip_gen: v6e
topology: v6e:2x2x1
jax: 0.10.0
libtpu: 0.0.40
codegen_flags: <defaults>
</compile_context>

<pallas_src>
import functools

import numpy as np
import jax
import jax.numpy as jnp
from jax.experimental import pallas as pl
from jax.experimental.pallas import tpu as pltpu


def _mha_kernel(q_ref, k_ref, v_ref, wq_ref, wk_ref, wv_ref, wo_ref,
                o_ref, kproj_ref, vproj_ref, heads_ref,
                *, scale, causal, h, dk, dv, tq):
    """Grid = (batch, q_tile).  Blocks:
       q_ref              : (1, TQ, dmodel) bf16   query tile
       k_ref / v_ref      : (1, L,  dmodel) bf16   full-length keys / values
       wq_ref / wk_ref    : (dmodel, h*dk)  bf16   fused projections (resident)
       wv_ref             : (dmodel, h*dv)  bf16
       wo_ref             : (h*dv, dmodel)  bf16   Wo^T (resident)
       o_ref              : (1, TQ, dmodel)        output tile
       kproj_ref/vproj_ref: (L, h*dk|h*dv)  bf16   scratch, reused across q-tiles
       heads_ref          : (TQ, h*dv)      bf16   scratch, per-q-tile head concat
    """
    qt = pl.program_id(1)

    # Hoisted full-width K/V projections: computed once per batch element
    # (q-tile 0), cached in VMEM scratch for every q-tile of that batch.
    @pl.when(qt == 0)
    def _():
        kproj_ref[...] = jnp.dot(
            k_ref[0], wk_ref[...],
            preferred_element_type=jnp.float32).astype(kproj_ref.dtype)
        vproj_ref[...] = jnp.dot(
            v_ref[0], wv_ref[...],
            preferred_element_type=jnp.float32).astype(vproj_ref.dtype)

    # Full-width Q projection for this q-tile; fold 1/sqrt(dk) into q
    # (TQ*h*dk multiplies instead of h*TQ*L multiplies on the score matrix).
    qproj = jnp.dot(q_ref[0], wq_ref[...],
                    preferred_element_type=jnp.float32) * scale       # (TQ, h*dk)

    L = kproj_ref.shape[0]
    if causal:  # static flag: mask built in-kernel, no HBM mask tensor
        row = qt * tq + jax.lax.broadcasted_iota(jnp.int32, (tq, L), 0)
        col = jax.lax.broadcasted_iota(jnp.int32, (tq, L), 1)
        causal_mask = col > row

    for i in range(h):
        qh = qproj[:, i * dk:(i + 1) * dk].astype(jnp.bfloat16)       # (TQ, dk)
        kh = kproj_ref[:, i * dk:(i + 1) * dk]                        # (L, dk)
        s = jax.lax.dot_general(qh, kh, (((1,), (1,)), ((), ())),
                                preferred_element_type=jnp.float32)   # (TQ, L)
        if causal:
            # Finite constant: avoids exp(-inf - (-inf)) = NaN on fully masked
            # rows (robustness; the diagonal keeps rows non-empty here anyway).
            s = jnp.where(causal_mask, jnp.float32(-1e30), s)

        # Numerically-stable softmax with DEFERRED normalization: divide the
        # (TQ, dv) PV result instead of the (TQ, L) probability matrix.
        m = jnp.max(s, axis=-1, keepdims=True)
        e = jnp.exp(s - m)                                            # EUP, f32
        denom = jnp.sum(e, axis=-1, keepdims=True)

        vh = vproj_ref[:, i * dv:(i + 1) * dv]                        # (L, dv)
        attn = jnp.dot(e.astype(jnp.bfloat16), vh,
                       preferred_element_type=jnp.float32)            # (TQ, dv)
        attn = attn * pl.reciprocal(denom, approx=True)
        heads_ref[:, i * dv:(i + 1) * dv] = attn.astype(heads_ref.dtype)

    # One fused, full-contraction (K = h*dv) output projection per q-tile.
    o_ref[0] = jnp.dot(heads_ref[...], wo_ref[...],
                       preferred_element_type=jnp.float32).astype(o_ref.dtype)


def multi_head_attention_forward(queries, keys, values, wq, wk, wv, wo,
                                 *, has_mask=False, q_tile=None):
    """queries/keys/values : (B, L, dmodel) float32
       wq, wk              : (h, dk, dmodel)  (PyTorch nn.Linear weight layout)
       wv                  : (h, dv, dmodel)
       wo                  : (dmodel, h*dv)
       returns             : (B, L, dmodel) float32
    """
    B, L, dmodel = queries.shape
    h, dk, _ = wq.shape
    dv = wv.shape[1]
    assert wo.shape == (dmodel, h * dv)

    # Query-length tile: must divide L; block dim must be a multiple of 8
    # (or equal to the full length).
    if q_tile is None:
        q_tile = L
        for cand in (512, 256, 128, 64, 32, 16, 8):
            if L % cand == 0:
                q_tile = cand
                break
    assert L % q_tile == 0, "q_tile must divide the sequence length"
    nq = L // q_tile

    # Fused MXU-width weight layouts, pre-transposed once in the wrapper
    # (no in-kernel XLU transposes), cast to bf16 for the MXU.
    wq_all = jnp.transpose(wq, (2, 0, 1)).reshape(dmodel, h * dk).astype(jnp.bfloat16)
    wk_all = jnp.transpose(wk, (2, 0, 1)).reshape(dmodel, h * dk).astype(jnp.bfloat16)
    wv_all = jnp.transpose(wv, (2, 0, 1)).reshape(dmodel, h * dv).astype(jnp.bfloat16)
    wo_t = jnp.transpose(wo, (1, 0)).astype(jnp.bfloat16)             # (h*dv, dmodel)

    q_bf = queries.astype(jnp.bfloat16)
    k_bf = keys.astype(jnp.bfloat16)
    v_bf = values.astype(jnp.bfloat16)

    kernel = functools.partial(
        _mha_kernel, scale=1.0 / float(np.sqrt(dk)), causal=bool(has_mask),
        h=h, dk=dk, dv=dv, tq=q_tile)

    q_map = lambda b, q: (b, q, 0)      # per-batch, per-q-tile activations
    kv_map = lambda b, q: (b, 0, 0)     # per-batch, full-length keys/values
    w_map = lambda b, q: (0, 0)         # resident weights: DMA'd once

    # Rough VMEM budget for the chosen tiles (double-buffered activations and
    # output, resident weights, scratch, score intermediates), clamped to
    # [32 MiB, 64 MiB] so it stays under v7x's 64 MiB physical VMEM.
    est = (2 * q_tile * dmodel * 2                       # q blocks (bf16, 2x)
           + 2 * 2 * L * dmodel * 2                      # k, v blocks
           + 2 * (2 * dmodel * h * dk                    # wq, wk
                  + dmodel * h * dv + h * dv * dmodel) * 2   # wv, wo
           + 2 * q_tile * dmodel * 4                     # output blocks (f32)
           + (L * h * dk + L * h * dv + q_tile * h * dv) * 2  # scratch
           + 4 * q_tile * L * 4)                         # score/exp live values
    vmem_limit = int(min(max(2 * est, 32 * 1024 * 1024), 64 * 1024 * 1024))

    return pl.pallas_call(
        kernel,
        out_shape=jax.ShapeDtypeStruct((B, L, dmodel), queries.dtype),
        grid_spec=pltpu.PrefetchScalarGridSpec(
            num_scalar_prefetch=0,
            grid=(B, nq),
            in_specs=[
                pl.BlockSpec((1, q_tile, dmodel), q_map),    # queries
                pl.BlockSpec((1, L, dmodel), kv_map),        # keys
                pl.BlockSpec((1, L, dmodel), kv_map),        # values
                pl.BlockSpec((dmodel, h * dk), w_map),       # Wq (all heads)
                pl.BlockSpec((dmodel, h * dk), w_map),       # Wk (all heads)
                pl.BlockSpec((dmodel, h * dv), w_map),       # Wv (all heads)
                pl.BlockSpec((h * dv, dmodel), w_map),       # Wo^T
            ],
            out_specs=pl.BlockSpec((1, q_tile, dmodel), q_map),
            scratch_shapes=[
                pltpu.VMEM((L, h * dk), jnp.bfloat16),        # K projection
                pltpu.VMEM((L, h * dv), jnp.bfloat16),        # V projection
                pltpu.VMEM((q_tile, h * dv), jnp.bfloat16),   # head concat
            ],
        ),
        compiler_params=pltpu.CompilerParams(
            # q axis stays "arbitrary": K/V projections are cached in VMEM
            # scratch across the q-tiles of each batch element.
            dimension_semantics=("parallel", "arbitrary"),
            vmem_limit_bytes=vmem_limit,
        ),
    )(q_bf, k_bf, v_bf, wq_all, wk_all, wv_all, wo_t)


def mha_reference(queries, keys, values, wq, wk, wv, wo, has_mask=False):
    """Pure-JAX mirror of the PyTorch MultiHeadAttention.forward."""
    h, dk, _ = wq.shape
    L = values.shape[1]
    heads = []
    for i in range(h):
        q = queries @ wq[i].T
        k = keys @ wk[i].T
        v = values @ wv[i].T
        s = jnp.einsum("bld,bmd->blm", q, k) / np.sqrt(dk)
        if has_mask:
            causal = jnp.where(
                jnp.arange(L)[None, :] > jnp.arange(L)[:, None],
                -jnp.inf, 0.0).astype(s.dtype)
            s = s + causal[None]
        w = jax.nn.softmax(s, axis=2)
        heads.append(jnp.einsum("blm,bmd->bld", w, v))
    cat = jnp.concatenate(heads, axis=2)
    return cat @ wo.T


if __name__ == "__main__":
    # Small deterministic config consistent with the module (scaled-down
    # defaults: h*dv == dmodel like the original 8*64 == 512).  q_tile=8 with
    # L=16 exercises the q-tiling path (two q-tiles per batch element).
    B, L = 2, 16
    h, dmodel, dk, dv = 4, 64, 16, 16

    key = jax.random.PRNGKey(0)
    kq, kk, kv, k1, k2, k3, k4 = jax.random.split(key, 7)
    queries = jax.random.normal(kq, (B, L, dmodel), dtype=jnp.float32)
    keys_in = jax.random.normal(kk, (B, L, dmodel), dtype=jnp.float32)
    values = jax.random.normal(kv, (B, L, dmodel), dtype=jnp.float32)

    wscale = 1.0 / np.sqrt(dmodel)
    wq = jax.random.normal(k1, (h, dk, dmodel), dtype=jnp.float32) * wscale
    wk = jax.random.normal(k2, (h, dk, dmodel), dtype=jnp.float32) * wscale
    wv = jax.random.normal(k3, (h, dv, dmodel), dtype=jnp.float32) * wscale
    wo = jax.random.normal(k4, (dmodel, h * dv), dtype=jnp.float32) / np.sqrt(h * dv)

    # No mask.
    out = multi_head_attention_forward(queries, keys_in, values,
                                       wq, wk, wv, wo, has_mask=False, q_tile=8)
    out = jax.block_until_ready(out)
    ref = mha_reference(queries, keys_in, values, wq, wk, wv, wo, has_mask=False)
    np.testing.assert_allclose(np.asarray(out), np.asarray(ref),
                               rtol=3e-2, atol=3e-2)

    # Causal mask path (has_mask=True in the PyTorch module).
    out_m = multi_head_attention_forward(queries, keys_in, values,
                                         wq, wk, wv, wo, has_mask=True, q_tile=8)
    out_m = jax.block_until_ready(out_m)
    ref_m = mha_reference(queries, keys_in, values, wq, wk, wv, wo, has_mask=True)
    np.testing.assert_allclose(np.asarray(out_m), np.asarray(ref_m),
                               rtol=3e-2, atol=3e-2)

    print("KERNEL_OK")
</pallas_src>

<mosaic_0001>
module attributes {stable_mosaic.version = 11 : i64} {
  func.func @_mha_kernel(%arg0: i32, %arg1: i32, %arg2: memref<1x8x64xbf16, #tpu.memory_space<vmem>>, %arg3: memref<1x16x64xbf16, #tpu.memory_space<vmem>>, %arg4: memref<1x16x64xbf16, #tpu.memory_space<vmem>>, %arg5: memref<64x64xbf16, #tpu.memory_space<vmem>>, %arg6: memref<64x64xbf16, #tpu.memory_space<vmem>>, %arg7: memref<64x64xbf16, #tpu.memory_space<vmem>>, %arg8: memref<64x64xbf16, #tpu.memory_space<vmem>>, %arg9: memref<1x8x64xf32, #tpu.memory_space<vmem>>, %arg10: memref<16x64xbf16, #tpu.memory_space<vmem>>, %arg11: memref<16x64xbf16, #tpu.memory_space<vmem>>, %arg12: memref<8x64xbf16, #tpu.memory_space<vmem>>) attributes {dimension_semantics = [#tpu.dimension_semantics<parallel>, #tpu.dimension_semantics<arbitrary>], iteration_bounds = array<i64: 2, 2>, scalar_prefetch = 0 : i64, scratch_operands = 3 : i64, tpu.core_type = #tpu.core_type<tc>, window_params = [{transform_indices = @transform_0, window_bounds = array<i64: 1, 8, 64>}, {transform_indices = @transform_1, window_bounds = array<i64: 1, 16, 64>}, {transform_indices = @transform_2, window_bounds = array<i64: 1, 16, 64>}, {pipeline_mode = #tpu.pipeline_mode<synchronous>, transform_indices = @transform_3, window_bounds = array<i64: 64, 64>}, {pipeline_mode = #tpu.pipeline_mode<synchronous>, transform_indices = @transform_4, window_bounds = array<i64: 64, 64>}, {pipeline_mode = #tpu.pipeline_mode<synchronous>, transform_indices = @transform_5, window_bounds = array<i64: 64, 64>}, {pipeline_mode = #tpu.pipeline_mode<synchronous>, transform_indices = @transform_6, window_bounds = array<i64: 64, 64>}, {transform_indices = @transform_7, window_bounds = array<i64: 1, 8, 64>}]} {
    %c0_i32 = arith.constant 0 : i32
    %0 = arith.cmpi eq, %arg1, %c0_i32 : i32
    %1 = arith.extui %0 : i1 to i32
    %c0_i32_0 = arith.constant 0 : i32
    %2 = arith.cmpi ne, %1, %c0_i32_0 : i32
    scf.if %2 {
      %c0_51 = arith.constant 0 : index
      %c0_52 = arith.constant 0 : index
      %c0_53 = arith.constant 0 : index
      %91 = vector.load %arg3[%c0_51, %c0_52, %c0_53] : memref<1x16x64xbf16, #tpu.memory_space<vmem>>, vector<1x16x64xbf16>
      %92 = vector.shape_cast %91 : vector<1x16x64xbf16> to vector<16x64xbf16>
      %c0_54 = arith.constant 0 : index
      %c0_55 = arith.constant 0 : index
      %93 = vector.load %arg6[%c0_54, %c0_55] : memref<64x64xbf16, #tpu.memory_space<vmem>>, vector<64x64xbf16>
      %cst_56 = arith.constant dense<0.000000e+00> : vector<16x64xf32>
      %94 = tpu.matmul %92, %93, %cst_56 {dimension_numbers = #tpu.dot_dimension_numbers<[1], [0], [0], [1], [0, 0, 1, 1], [], []>} : vector<16x64xbf16>, vector<64x64xbf16>, vector<16x64xf32> -> vector<16x64xf32>
      %95 = arith.truncf %94 : vector<16x64xf32> to vector<16x64xbf16>
      %c0_57 = arith.constant 0 : index
      %c0_58 = arith.constant 0 : index
      %96 = vector.load %arg10[%c0_57, %c0_58] : memref<16x64xbf16, #tpu.memory_space<vmem>>, vector<16x64xbf16>
      tpu.vector_store %arg10[%c0_57, %c0_58], %95 {strides = array<i32>} : memref<16x64xbf16, #tpu.memory_space<vmem>>, vector<16x64xbf16>,
      %c0_59 = arith.constant 0 : index
      %c0_60 = arith.constant 0 : index
      %c0_61 = arith.constant 0 : index
      %97 = vector.load %arg4[%c0_59, %c0_60, %c0_61] : memref<1x16x64xbf16, #tpu.memory_space<vmem>>, vector<1x16x64xbf16>
      %98 = vector.shape_cast %97 : vector<1x16x64xbf16> to vector<16x64xbf16>
      %c0_62 = arith.constant 0 : index
      %c0_63 = arith.constant 0 : index
      %99 = vector.load %arg7[%c0_62, %c0_63] : memref<64x64xbf16, #tpu.memory_space<vmem>>, vector<64x64xbf16>
      %cst_64 = arith.constant dense<0.000000e+00> : vector<16x64xf32>
      %100 = tpu.matmul %98, %99, %cst_64 {dimension_numbers = #tpu.dot_dimension_numbers<[1], [0], [0], [1], [0, 0, 1, 1], [], []>} : vector<16x64xbf16>, vector<64x64xbf16>, vector<16x64xf32> -> vector<16x64xf32>
      %101 = arith.truncf %100 : vector<16x64xf32> to vector<16x64xbf16>
      %c0_65 = arith.constant 0 : index
      %c0_66 = arith.constant 0 : index
      %102 = vector.load %arg11[%c0_65, %c0_66] : memref<16x64xbf16, #tpu.memory_space<vmem>>, vector<16x64xbf16>
      tpu.vector_store %arg11[%c0_65, %c0_66], %101 {strides = array<i32>} : memref<16x64xbf16, #tpu.memory_space<vmem>>, vector<16x64xbf16>,
    } else {
    }
    %c0 = arith.constant 0 : index
    %c0_1 = arith.constant 0 : index
    %c0_2 = arith.constant 0 : index
    %3 = vector.load %arg2[%c0, %c0_1, %c0_2] : memref<1x8x64xbf16, #tpu.memory_space<vmem>>, vector<1x8x64xbf16>
    %4 = vector.shape_cast %3 : vector<1x8x64xbf16> to vector<8x64xbf16>
    %c0_3 = arith.constant 0 : index
    %c0_4 = arith.constant 0 : index
    %5 = vector.load %arg5[%c0_3, %c0_4] : memref<64x64xbf16, #tpu.memory_space<vmem>>, vector<64x64xbf16>
    %cst = arith.constant dense<0.000000e+00> : vector<8x64xf32>
    %6 = tpu.matmul %4, %5, %cst {dimension_numbers = #tpu.dot_dimension_numbers<[1], [0], [0], [1], [0, 0, 1, 1], [], []>} : vector<8x64xbf16>, vector<64x64xbf16>, vector<8x64xf32> -> vector<8x64xf32>
    %cst_5 = arith.constant 2.500000e-01 : f32
    %7 = vector.broadcast %cst_5 : f32 to vector<8x64xf32>
    %8 = arith.mulf %6, %7 : vector<8x64xf32>
    %9 = vector.extract_strided_slice %8 {offsets = [0, 0], sizes = [8, 16], strides = [1, 1]} : vector<8x64xf32> to vector<8x16xf32>
    %10 = arith.truncf %9 : vector<8x16xf32> to vector<8x16xbf16>
    %c0_6 = arith.constant 0 : index
    %c0_7 = arith.constant 0 : index
    %11 = vector.load %arg10[%c0_6, %c0_7] : memref<16x64xbf16, #tpu.memory_space<vmem>>, vector<16x16xbf16>
    %cst_8 = arith.constant dense<0.000000e+00> : vector<8x16xf32>
    %12 = tpu.matmul %10, %11, %cst_8 {dimension_numbers = #tpu.dot_dimension_numbers<[1], [1], [0], [0], [0, 0, 1, 0], [], []>} : vector<8x16xbf16>, vector<16x16xbf16>, vector<8x16xf32> -> vector<8x16xf32>
    %cst_9 = arith.constant dense<0xFF800000> : vector<8xf32>
    %13 = vector.multi_reduction <maximumf>, %12, %cst_9 [1] : vector<8x16xf32> to vector<8xf32>
    %14 = vector.shape_cast %13 : vector<8xf32> to vector<8x1xf32>
    %15 = vector.broadcast %14 : vector<8x1xf32> to vector<8x16xf32>
    %16 = arith.subf %12, %15 : vector<8x16xf32>
    %17 = math.exp %16 : vector<8x16xf32>
    %cst_10 = arith.constant dense<0.000000e+00> : vector<8xf32>
    %18 = vector.multi_reduction <add>, %17, %cst_10 [1] : vector<8x16xf32> to vector<8xf32>
    %19 = vector.shape_cast %18 : vector<8xf32> to vector<8x1xf32>
    %c0_11 = arith.constant 0 : index
    %c0_12 = arith.constant 0 : index
    %20 = vector.load %arg11[%c0_11, %c0_12] : memref<16x64xbf16, #tpu.memory_space<vmem>>, vector<16x16xbf16>
    %21 = arith.truncf %17 : vector<8x16xf32> to vector<8x16xbf16>
    %cst_13 = arith.constant dense<0.000000e+00> : vector<8x16xf32>
    %22 = tpu.matmul %21, %20, %cst_13 {dimension_numbers = #tpu.dot_dimension_numbers<[1], [0], [0], [1], [0, 0, 1, 1], [], []>} : vector<8x16xbf16>, vector<16x16xbf16>, vector<8x16xf32> -> vector<8x16xf32>
    %23 = tpu.reciprocal %19 {approx = true} : vector<8x1xf32> -> vector<8x1xf32>
    %24 = vector.broadcast %23 : vector<8x1xf32> to vector<8x16xf32>
    %25 = arith.mulf %22, %24 : vector<8x16xf32>
    %26 = arith.truncf %25 : vector<8x16xf32> to vector<8x16xbf16>
    %c0_14 = arith.constant 0 : index
    %c0_15 = arith.constant 0 : index
    %27 = vector.load %arg12[%c0_14, %c0_15] : memref<8x64xbf16, #tpu.memory_space<vmem>>, vector<8x16xbf16>
    tpu.vector_store %arg12[%c0_14, %c0_15], %26 {strides = array<i32>} : memref<8x64xbf16, #tpu.memory_space<vmem>>, vector<8x16xbf16>,
    %28 = vector.extract_strided_slice %8 {offsets = [0, 16], sizes = [8, 16], strides = [1, 1]} : vector<8x64xf32> to vector<8x16xf32>
    %29 = arith.truncf %28 : vector<8x16xf32> to vector<8x16xbf16>
    %c0_16 = arith.constant 0 : index
    %c16 = arith.constant 16 : index
    %30 = vector.load %arg10[%c0_16, %c16] : memref<16x64xbf16, #tpu.memory_space<vmem>>, vector<16x16xbf16>
    %cst_17 = arith.constant dense<0.000000e+00> : vector<8x16xf32>
    %31 = tpu.matmul %29, %30, %cst_17 {dimension_numbers = #tpu.dot_dimension_numbers<[1], [1], [0], [0], [0, 0, 1, 0], [], []>} : vector<8x16xbf16>, vector<16x16xbf16>, vector<8x16xf32> -> vector<8x16xf32>
    %cst_18 = arith.constant dense<0xFF800000> : vector<8xf32>
    %32 = vector.multi_reduction <maximumf>, %31, %cst_18 [1] : vector<8x16xf32> to vector<8xf32>
    %33 = vector.shape_cast %32 : vector<8xf32> to vector<8x1xf32>
    %34 = vector.broadcast %33 : vector<8x1xf32> to vector<8x16xf32>
    %35 = arith.subf %31, %34 : vector<8x16xf32>
    %36 = math.exp %35 : vector<8x16xf32>
    %cst_19 = arith.constant dense<0.000000e+00> : vector<8xf32>
    %37 = vector.multi_reduction <add>, %36, %cst_19 [1] : vector<8x16xf32> to vector<8xf32>
    %38 = vector.shape_cast %37 : vector<8xf32> to vector<8x1xf32>
    %c0_20 = arith.constant 0 : index
    %c16_21 = arith.constant 16 : index
    %39 = vector.load %arg11[%c0_20, %c16_21] : memref<16x64xbf16, #tpu.memory_space<vmem>>, vector<16x16xbf16>
    %40 = arith.truncf %36 : vector<8x16xf32> to vector<8x16xbf16>
    %cst_22 = arith.constant dense<0.000000e+00> : vector<8x16xf32>
    %41 = tpu.matmul %40, %39, %cst_22 {dimension_numbers = #tpu.dot_dimension_numbers<[1], [0], [0], [1], [0, 0, 1, 1], [], []>} : vector<8x16xbf16>, vector<16x16xbf16>, vector<8x16xf32> -> vector<8x16xf32>
    %42 = tpu.reciprocal %38 {approx = true} : vector<8x1xf32> -> vector<8x1xf32>
    %43 = vector.broadcast %42 : vector<8x1xf32> to vector<8x16xf32>
    %44 = arith.mulf %41, %43 : vector<8x16xf32>
    %45 = arith.truncf %44 : vector<8x16xf32> to vector<8x16xbf16>
    %c0_23 = arith.constant 0 : index
    %c16_24 = arith.constant 16 : index
    %46 = vector.load %arg12[%c0_23, %c16_24] : memref<8x64xbf16, #tpu.memory_space<vmem>>, vector<8x16xbf16>
    tpu.vector_store %arg12[%c0_23, %c16_24], %45 {strides = array<i32>} : memref<8x64xbf16, #tpu.memory_space<vmem>>, vector<8x16xbf16>,
    %47 = vector.extract_strided_slice %8 {offsets = [0, 32], sizes = [8, 16], strides = [1, 1]} : vector<8x64xf32> to vector<8x16xf32>
    %48 = arith.truncf %47 : vector<8x16xf32> to vector<8x16xbf16>
    %c0_25 = arith.constant 0 : index
    %c32 = arith.constant 32 : index
    %49 = vector.load %arg10[%c0_25, %c32] : memref<16x64xbf16, #tpu.memory_space<vmem>>, vector<16x16xbf16>
    %cst_26 = arith.constant dense<0.000000e+00> : vector<8x16xf32>
    %50 = tpu.matmul %48, %49, %cst_26 {dimension_numbers = #tpu.dot_dimension_numbers<[1], [1], [0], [0], [0, 0, 1, 0], [], []>} : vector<8x16xbf16>, vector<16x16xbf16>, vector<8x16xf32> -> vector<8x16xf32>
    %cst_27 = arith.constant dense<0xFF800000> : vector<8xf32>
    %51 = vector.multi_reduction <maximumf>, %50, %cst_27 [1] : vector<8x16xf32> to vector<8xf32>
    %52 = vector.shape_cast %51 : vector<8xf32> to vector<8x1xf32>
    %53 = vector.broadcast %52 : vector<8x1xf32> to vector<8x16xf32>
    %54 = arith.subf %50, %53 : vector<8x16xf32>
    %55 = math.exp %54 : vector<8x16xf32>
    %cst_28 = arith.constant dense<0.000000e+00> : vector<8xf32>
    %56 = vector.multi_reduction <add>, %55, %cst_28 [1] : vector<8x16xf32> to vector<8xf32>
    %57 = vector.shape_cast %56 : vector<8xf32> to vector<8x1xf32>
    %c0_29 = arith.constant 0 : index
    %c32_30 = arith.constant 32 : index
    %58 = vector.load %arg11[%c0_29, %c32_30] : memref<16x64xbf16, #tpu.memory_space<vmem>>, vector<16x16xbf16>
    %59 = arith.truncf %55 : vector<8x16xf32> to vector<8x16xbf16>
    %cst_31 = arith.constant dense<0.000000e+00> : vector<8x16xf32>
    %60 = tpu.matmul %59, %58, %cst_31 {dimension_numbers = #tpu.dot_dimension_numbers<[1], [0], [0], [1], [0, 0, 1, 1], [], []>} : vector<8x16xbf16>, vector<16x16xbf16>, vector<8x16xf32> -> vector<8x16xf32>
    %61 = tpu.reciprocal %57 {approx = true} : vector<8x1xf32> -> vector<8x1xf32>
    %62 = vector.broadcast %61 : vector<8x1xf32> to vector<8x16xf32>
    %63 = arith.mulf %60, %62 : vector<8x16xf32>
    %64 = arith.truncf %63 : vector<8x16xf32> to vector<8x16xbf16>
    %c0_32 = arith.constant 0 : index
    %c32_33 = arith.constant 32 : index
    %65 = vector.load %arg12[%c0_32, %c32_33] : memref<8x64xbf16, #tpu.memory_space<vmem>>, vector<8x16xbf16>
    tpu.vector_store %arg12[%c0_32, %c32_33], %64 {strides = array<i32>} : memref<8x64xbf16, #tpu.memory_space<vmem>>, vector<8x16xbf16>,
    %66 = vector.extract_strided_slice %8 {offsets = [0, 48], sizes = [8, 16], strides = [1, 1]} : vector<8x64xf32> to vector<8x16xf32>
    %67 = arith.truncf %66 : vector<8x16xf32> to vector<8x16xbf16>
    %c0_34 = arith.constant 0 : index
    %c48 = arith.constant 48 : index
    %68 = vector.load %arg10[%c0_34, %c48] : memref<16x64xbf16, #tpu.memory_space<vmem>>, vector<16x16xbf16>
    %cst_35 = arith.constant dense<0.000000e+00> : vector<8x16xf32>
    %69 = tpu.matmul %67, %68, %cst_35 {dimension_numbers = #tpu.dot_dimension_numbers<[1], [1], [0], [0], [0, 0, 1, 0], [], []>} : vector<8x16xbf16>, vector<16x16xbf16>, vector<8x16xf32> -> vector<8x16xf32>
    %cst_36 = arith.constant dense<0xFF800000> : vector<8xf32>
    %70 = vector.multi_reduction <maximumf>, %69, %cst_36 [1] : vector<8x16xf32> to vector<8xf32>
    %71 = vector.shape_cast %70 : vector<8xf32> to vector<8x1xf32>
    %72 = vector.broadcast %71 : vector<8x1xf32> to vector<8x16xf32>
    %73 = arith.subf %69, %72 : vector<8x16xf32>
    %74 = math.exp %73 : vector<8x16xf32>
    %cst_37 = arith.constant dense<0.000000e+00> : vector<8xf32>
    %75 = vector.multi_reduction <add>, %74, %cst_37 [1] : vector<8x16xf32> to vector<8xf32>
    %76 = vector.shape_cast %75 : vector<8xf32> to vector<8x1xf32>
    %c0_38 = arith.constant 0 : index
    %c48_39 = arith.constant 48 : index
    %77 = vector.load %arg11[%c0_38, %c48_39] : memref<16x64xbf16, #tpu.memory_space<vmem>>, vector<16x16xbf16>
    %78 = arith.truncf %74 : vector<8x16xf32> to vector<8x16xbf16>
    %cst_40 = arith.constant dense<0.000000e+00> : vector<8x16xf32>
    %79 = tpu.matmul %78, %77, %cst_40 {dimension_numbers = #tpu.dot_dimension_numbers<[1], [0], [0], [1], [0, 0, 1, 1], [], []>} : vector<8x16xbf16>, vector<16x16xbf16>, vector<8x16xf32> -> vector<8x16xf32>
    %80 = tpu.reciprocal %76 {approx = true} : vector<8x1xf32> -> vector<8x1xf32>
    %81 = vector.broadcast %80 : vector<8x1xf32> to vector<8x16xf32>
    %82 = arith.mulf %79, %81 : vector<8x16xf32>
    %83 = arith.truncf %82 : vector<8x16xf32> to vector<8x16xbf16>
    %c0_41 = arith.constant 0 : index
    %c48_42 = arith.constant 48 : index
    %84 = vector.load %arg12[%c0_41, %c48_42] : memref<8x64xbf16, #tpu.memory_space<vmem>>, vector<8x16xbf16>
    tpu.vector_store %arg12[%c0_41, %c48_42], %83 {strides = array<i32>} : memref<8x64xbf16, #tpu.memory_space<vmem>>, vector<8x16xbf16>,
    %c0_43 = arith.constant 0 : index
    %c0_44 = arith.constant 0 : index
    %85 = vector.load %arg12[%c0_43, %c0_44] : memref<8x64xbf16, #tpu.memory_space<vmem>>, vector<8x64xbf16>
    %c0_45 = arith.constant 0 : index
    %c0_46 = arith.constant 0 : index
    %86 = vector.load %arg8[%c0_45, %c0_46] : memref<64x64xbf16, #tpu.memory_space<vmem>>, vector<64x64xbf16>
    %cst_47 = arith.constant dense<0.000000e+00> : vector<8x64xf32>
    %87 = tpu.matmul %85, %86, %cst_47 {dimension_numbers = #tpu.dot_dimension_numbers<[1], [0], [0], [1], [0, 0, 1, 1], [], []>} : vector<8x64xbf16>, vector<64x64xbf16>, vector<8x64xf32> -> vector<8x64xf32>
    %c0_48 = arith.constant 0 : index
    %c0_49 = arith.constant 0 : index
    %c0_50 = arith.constant 0 : index
    %88 = vector.load %arg9[%c0_48, %c0_49, %c0_50] : memref<1x8x64xf32, #tpu.memory_space<vmem>>, vector<1x8x64xf32>
    %89 = vector.shape_cast %88 : vector<1x8x64xf32> to vector<8x64xf32>
    %90 = vector.shape_cast %87 : vector<8x64xf32> to vector<1x8x64xf32>
    tpu.vector_store %arg9[%c0_48, %c0_49, %c0_50], %90 {strides = array<i32>} : memref<1x8x64xf32, #tpu.memory_space<vmem>>, vector<1x8x64xf32>,
    return
  }
  func.func @transform_0(%arg0: i32, %arg1: i32) -> (i32, i32, i32) {
    %c0_i32 = arith.constant 0 : i32
    %c0_i32_0 = arith.constant 0 : i32
    return %arg0, %arg1, %c0_i32 : i32, i32, i32
  }
  func.func @transform_1(%arg0: i32, %arg1: i32) -> (i32, i32, i32) {
    %c0_i32 = arith.constant 0 : i32
    %c0_i32_0 = arith.constant 0 : i32
    %c0_i32_1 = arith.constant 0 : i32
    return %arg0, %c0_i32, %c0_i32_0 : i32, i32, i32
  }
  func.func @transform_2(%arg0: i32, %arg1: i32) -> (i32, i32, i32) {
    %c0_i32 = arith.constant 0 : i32
    %c0_i32_0 = arith.constant 0 : i32
    %c0_i32_1 = arith.constant 0 : i32
    return %arg0, %c0_i32, %c0_i32_0 : i32, i32, i32
  }
  func.func @transform_3(%arg0: i32, %arg1: i32) -> (i32, i32) {
    %c0_i32 = arith.constant 0 : i32
    %c0_i32_0 = arith.constant 0 : i32
    %c0_i32_1 = arith.constant 0 : i32
    return %c0_i32, %c0_i32_0 : i32, i32
  }
  func.func @transform_4(%arg0: i32, %arg1: i32) -> (i32, i32) {
    %c0_i32 = arith.constant 0 : i32
    %c0_i32_0 = arith.constant 0 : i32
    %c0_i32_1 = arith.constant 0 : i32
    return %c0_i32, %c0_i32_0 : i32, i32
  }
  func.func @transform_5(%arg0: i32, %arg1: i32) -> (i32, i32) {
    %c0_i32 = arith.constant 0 : i32
    %c0_i32_0 = arith.constant 0 : i32
    %c0_i32_1 = arith.constant 0 : i32
    return %c0_i32, %c0_i32_0 : i32, i32
  }
  func.func @transform_6(%arg0: i32, %arg1: i32) -> (i32, i32) {
    %c0_i32 = arith.constant 0 : i32
    %c0_i32_0 = arith.constant 0 : i32
    %c0_i32_1 = arith.constant 0 : i32
    return %c0_i32, %c0_i32_0 : i32, i32
  }
  func.func @transform_7(%arg0: i32, %arg1: i32) -> (i32, i32, i32) {
    %c0_i32 = arith.constant 0 : i32
    %c0_i32_0 = arith.constant 0 : i32
    return %arg0, %arg1, %c0_i32 : i32, i32, i32
  }
}

</mosaic_0001>

<llo_original>
// kernel: tpu_custom_call.1
$region0: #{tpu_custom_call.1}
  #allocation0 [shape = 'u32[]', space=smem, size = 0x4, offset = 0x4, fixed_abs, tag = 'smem constant byte address 0x4 - core index']
  #allocation1 [shape = 'u32[144,128]{1,0:T(1,128)}', space=vmem, size = 0x12000, scoped, tag = 'internal scratch']
  #allocation2 [shape = 'bf16[16,64]{1,0:T(8,128)(2,1)}', space=vmem, size = 0x1000, scoped, tag = 'scratch operand']
  #allocation3 [shape = 'bf16[16,64]{1,0:T(8,128)(2,1)}', space=vmem, size = 0x1000, scoped, tag = 'scratch operand']
  #allocation4 [shape = 'bf16[8,64]{1,0:T(8,128)(2,1)}', space=vmem, size = 0x800, scoped, tag = 'scratch operand']
  %s0 = inlined_call_operand.hbm [shape: bf16[2,16,64], index: 0, kind: input, shape index: {}]
  %s1 = inlined_call_operand.hbm [shape: bf16[2,16,64], index: 1, kind: input, shape index: {}]
  %s2 = inlined_call_operand.hbm [shape: bf16[2,16,64], index: 2, kind: input, shape index: {}]
  %s3 = inlined_call_operand.hbm [shape: bf16[64,64], index: 3, kind: input, shape index: {}]
  %s4 = inlined_call_operand.hbm [shape: bf16[64,64], index: 4, kind: input, shape index: {}]
  %s5 = inlined_call_operand.hbm [shape: bf16[64,64], index: 5, kind: input, shape index: {}]
  %s6 = inlined_call_operand.hbm [shape: bf16[64,64], index: 6, kind: input, shape index: {}]
  %s7 = inlined_call_operand.hbm [shape: f32[2,16,64], index: 7, kind: output, shape index: {}]
  %s8 = sld [smem:[#allocation0]]
  $region93: #{tpu_custom_call.1} parent=0
    _
  %s10 = ssub.s32 1, %s8
  %s11 = scalar_select 0, %s10, %s8
  $region1: #{tpu_custom_call.1} parent=0
    #allocation5 [shape = 'u8[4096]{0}', space=vmem, size = 0x1000, scoped, tag = 'input window, operand 0']
    #allocation6 [shape = 's32[2]{0}', space=sflag, size = 0x8, scoped, tag = 'scoped memory for tpu_custom_call.1']
    #allocation7 [shape = 's32[2]{0}', space=sflag, size = 0x8, scoped, tag = 'scoped memory for tpu_custom_call.1']
    #allocation8 [shape = 'u8[8192]{0}', space=vmem, size = 0x2000, scoped, tag = 'input window, operand 1']
    #allocation9 [shape = 's32[2]{0}', space=sflag, size = 0x8, scoped, tag = 'scoped memory for tpu_custom_call.1']
    #allocation10 [shape = 'u8[8192]{0}', space=vmem, size = 0x2000, scoped, tag = 'input window, operand 2']
    #allocation11 [shape = 'u8[16384]{0}', space=vmem, size = 0x4000, scoped, tag = 'input window, operand 3, single buffered']
    #allocation12 [shape = 's32[1]{0}', space=sflag, size = 0x4, scoped, tag = 'scoped memory for tpu_custom_call.1']
    #allocation13 [shape = 'u8[16384]{0}', space=vmem, size = 0x4000, scoped, tag = 'input window, operand 4, single buffered']
    #allocation14 [shape = 'u8[16384]{0}', space=vmem, size = 0x4000, scoped, tag = 'input window, operand 5, single buffered']
    #allocation15 [shape = 's32[1]{0}', space=sflag, size = 0x4, scoped, tag = 'scoped memory for tpu_custom_call.1']
    #allocation16 [shape = 'u8[16384]{0}', space=vmem, size = 0x4000, scoped, tag = 'input window, operand 6, single buffered']
    #allocation17 [shape = 'u8[8192]{0}', space=vmem, size = 0x2000, scoped, tag = 'output window, operand 0']
    %12 = vsyncpa [#allocation6], 0
    %s13 = scalar_lea.sflag [#allocation6], 1
    %14 = vsyncpa %s13, 0
    %15 = vsyncpa [#allocation9], 0
    %s16 = scalar_lea.sflag [#allocation9], 1
    %17 = vsyncpa %s16, 0
    %18 = vsyncpa [#allocation12], 0
    %19 = vsyncpa [#allocation15], 0
    %20 = vsyncpa [#allocation7], 0
    %s21 = scalar_lea.sflag [#allocation7], 1
    %22 = vsyncpa %s21, 0
    loop: start=0, step=1, limit=6
    $region2: #{tpu_custom_call.1} parent=1 // loop_pre_header
      _
    $region3: #{tpu_custom_call.1} parent=1 // loop_header
      %s24 = sphi 0, %s28
      %p25 = scmp.ge.s32.totalorder %s24, 6
      %s31 = sphi 0, %s43
      %s32 = sphi 0, %s39
      %s33 = sphi 0, %s31
      %s34 = sphi 0, %s32
      %s35 = sphi 0, %s33
      %s36 = sphi 0, %s34
      %s48 = sphi 0, %s50
      %s51 = sphi 0, %s48
      %s52 = sphi 0, %s51
      %s68 = sphi 0, %s52
      %s74 = sphi 0, %s76
      %s77 = sphi 0, %s74
      %s78 = sphi 0, %s77
      %s94 = sphi 0, %s78
      %s100 = sphi 0, %s102
      %s103 = sphi 0, %s100
      %s104 = sphi 0, %s103
      %s120 = sphi 0, %s104
      %s124 = sphi 0, %s124
      %s126 = sphi 0, %s124
      %s127 = sphi 0, %s126
      %s141 = sphi 0, %s127
      %s145 = sphi 0, %s145
      %s147 = sphi 0, %s145
      %s148 = sphi 0, %s147
      %s162 = sphi 0, %s148
      %s166 = sphi 0, %s166
      %s168 = sphi 0, %s166
      %s169 = sphi 0, %s168
      %s183 = sphi 0, %s169
      %s187 = sphi 0, %s187
      %s189 = sphi 0, %s187
      %s190 = sphi 0, %s189
      %s204 = sphi 0, %s190
      %s212 = sphi 0, %s214
      %s215 = sphi 0, %s212
      %s216 = sphi 0, %s215
      %s232 = sphi 0, %s216
    $region4: #{tpu_custom_call.1} parent=1 // loop_header_branch
      %27 = sbr.rel (%p25) target = $region8
    $region5: #{tpu_custom_call.1} parent=1 // loop_body
      %s29 = ssub.s32 %s24, 1
      %s30 = ssub.s32 %s24, 2
      %s37 = sadd.s32 1, %s32
      %p38 = scmp.ge.s32.totalorder %s37, 2
      %s39 = scalar_select %p38, 0, %s37
      %s40 = sadd.s32 1, %s31
      %s41 = scalar_select %p38, %s40, %s31
      %p42 = scmp.ge.s32.totalorder %s41, 2
      %s43 = scalar_select %p42, 0, %s41
      %s44 = ssub.s32 %s31, %s43
      %s45 = ssub.s32 %s32, %s39
      %s46 = sor.u32 %s44, %s45
      %p47 = scmp.eq.s32.totalorder %s46, 0
      %s49 = sadd.s32 %s48, 1
      %s50 = scalar_select %p47, %s48, %s49
      %p53 = pneg %p47
      %p54 = scmp.eq.s32.totalorder %s24, 3
      %p55 = por %p53, %p54
      %p56 = scmp.ne.s32.totalorder %s48, %s51
      %p57 = scmp.eq.s32.totalorder %s24, 0
      %p58 = por %p56, %p57
      %p59 = scmp.ne.s32.totalorder %s48, %s51
      %p60 = scmp.eq.s32.totalorder %s29, 3
      %p61 = por %p59, %p60
      %p62 = scmp.ne.s32.totalorder %s51, %s52
      %p63 = scmp.eq.s32.totalorder %s29, 0
      %p64 = por %p62, %p63
      %p65 = scmp.ne.s32.totalorder %s51, %s52
      %p66 = scmp.eq.s32.totalorder %s30, 3
      %p67 = por %p65, %p66
      %p69 = scmp.ne.s32.totalorder %s52, %s68
      %p70 = scmp.eq.s32.totalorder %s30, 0
      %p71 = por %p69, %p70
      %s72 = ssub.s32 %s31, %s43
      %p73 = scmp.eq.s32.totalorder %s72, 0
      %s75 = sadd.s32 %s74, 1
      %s76 = scalar_select %p73, %s74, %s75
      %p79 = pneg %p73
      %p80 = scmp.eq.s32.totalorder %s24, 3
      %p81 = por %p79, %p80
      %p82 = scmp.ne.s32.totalorder %s74, %s77
      %p83 = scmp.eq.s32.totalorder %s24, 0
      %p84 = por %p82, %p83
      %p85 = scmp.ne.s32.totalorder %s74, %s77
      %p86 = scmp.eq.s32.totalorder %s29, 3
      %p87 = por %p85, %p86
      %p88 = scmp.ne.s32.totalorder %s77, %s78
      %p89 = scmp.eq.s32.totalorder %s29, 0
      %p90 = por %p88, %p89
      %p91 = scmp.ne.s32.totalorder %s77, %s78
      %p92 = scmp.eq.s32.totalorder %s30, 3
      %p93 = por %p91, %p92
      %p95 = scmp.ne.s32.totalorder %s78, %s94
      %p96 = scmp.eq.s32.totalorder %s30, 0
      %p97 = por %p95, %p96
      %s98 = ssub.s32 %s31, %s43
      %p99 = scmp.eq.s32.totalorder %s98, 0
      %s101 = sadd.s32 %s100, 1
      %s102 = scalar_select %p99, %s100, %s101
      %p105 = pneg %p99
      %p106 = scmp.eq.s32.totalorder %s24, 3
      %p107 = por %p105, %p106
      %p108 = scmp.ne.s32.totalorder %s100, %s103
      %p109 = scmp.eq.s32.totalorder %s24, 0
      %p110 = por %p108, %p109
      %p111 = scmp.ne.s32.totalorder %s100, %s103
      %p112 = scmp.eq.s32.totalorder %s29, 3
      %p113 = por %p111, %p112
      %p114 = scmp.ne.s32.totalorder %s103, %s104
      %p115 = scmp.eq.s32.totalorder %s29, 0
      %p116 = por %p114, %p115
      %p117 = scmp.ne.s32.totalorder %s103, %s104
      %p118 = scmp.eq.s32.totalorder %s30, 3
      %p119 = por %p117, %p118
      %p121 = scmp.ne.s32.totalorder %s104, %s120
      %p122 = scmp.eq.s32.totalorder %s30, 0
      %p123 = por %p121, %p122
      %s125 = sadd.s32 %s124, 1
      %p128 = scmp.eq.s32.totalorder %s24, 3
      %p129 = scmp.ne.s32.totalorder %s124, %s126
      %p130 = scmp.eq.s32.totalorder %s24, 0
      %p131 = por %p129, %p130
      %p132 = scmp.ne.s32.totalorder %s124, %s126
      %p133 = scmp.eq.s32.totalorder %s29, 3
      %p134 = por %p132, %p133
      %p135 = scmp.ne.s32.totalorder %s126, %s127
      %p136 = scmp.eq.s32.totalorder %s29, 0
      %p137 = por %p135, %p136
      %p138 = scmp.ne.s32.totalorder %s126, %s127
      %p139 = scmp.eq.s32.totalorder %s30, 3
      %p140 = por %p138, %p139
      %p142 = scmp.ne.s32.totalorder %s127, %s141
      %p143 = scmp.eq.s32.totalorder %s30, 0
      %p144 = por %p142, %p143
      %s146 = sadd.s32 %s145, 1
      %p149 = scmp.eq.s32.totalorder %s24, 3
      %p150 = scmp.ne.s32.totalorder %s145, %s147
      %p151 = scmp.eq.s32.totalorder %s24, 0
      %p152 = por %p150, %p151
      %p153 = scmp.ne.s32.totalorder %s145, %s147
      %p154 = scmp.eq.s32.totalorder %s29, 3
      %p155 = por %p153, %p154
      %p156 = scmp.ne.s32.totalorder %s147, %s148
      %p157 = scmp.eq.s32.totalorder %s29, 0
      %p158 = por %p156, %p157
      %p159 = scmp.ne.s32.totalorder %s147, %s148
      %p160 = scmp.eq.s32.totalorder %s30, 3
      %p161 = por %p159, %p160
      %p163 = scmp.ne.s32.totalorder %s148, %s162
      %p164 = scmp.eq.s32.totalorder %s30, 0
      %p165 = por %p163, %p164
      %s167 = sadd.s32 %s166, 1
      %p170 = scmp.eq.s32.totalorder %s24, 3
      %p171 = scmp.ne.s32.totalorder %s166, %s168
      %p172 = scmp.eq.s32.totalorder %s24, 0
      %p173 = por %p171, %p172
      %p174 = scmp.ne.s32.totalorder %s166, %s168
      %p175 = scmp.eq.s32.totalorder %s29, 3
      %p176 = por %p174, %p175
      %p177 = scmp.ne.s32.totalorder %s168, %s169
      %p178 = scmp.eq.s32.totalorder %s29, 0
      %p179 = por %p177, %p178
      %p180 = scmp.ne.s32.totalorder %s168, %s169
      %p181 = scmp.eq.s32.totalorder %s30, 3
      %p182 = por %p180, %p181
      %p184 = scmp.ne.s32.totalorder %s169, %s183
      %p185 = scmp.eq.s32.totalorder %s30, 0
      %p186 = por %p184, %p185
      %s188 = sadd.s32 %s187, 1
      %p191 = scmp.eq.s32.totalorder %s24, 3
      %p192 = scmp.ne.s32.totalorder %s187, %s189
      %p193 = scmp.eq.s32.totalorder %s24, 0
      %p194 = por %p192, %p193
      %p195 = scmp.ne.s32.totalorder %s187, %s189
      %p196 = scmp.eq.s32.totalorder %s29, 3
      %p197 = por %p195, %p196
      %p198 = scmp.ne.s32.totalorder %s189, %s190
      %p199 = scmp.eq.s32.totalorder %s29, 0
      %p200 = por %p198, %p199
      %p201 = scmp.ne.s32.totalorder %s189, %s190
      %p202 = scmp.eq.s32.totalorder %s30, 3
      %p203 = por %p201, %p202
      %p205 = scmp.ne.s32.totalorder %s190, %s204
      %p206 = scmp.eq.s32.totalorder %s30, 0
      %p207 = por %p205, %p206
      %s208 = ssub.s32 %s31, %s43
      %s209 = ssub.s32 %s32, %s39
      %s210 = sor.u32 %s208, %s209
      %p211 = scmp.eq.s32.totalorder %s210, 0
      %s213 = sadd.s32 %s212, 1
      %s214 = scalar_select %p211, %s212, %s213
      %p217 = pneg %p211
      %p218 = scmp.eq.s32.totalorder %s24, 3
      %p219 = por %p217, %p218
      %p220 = scmp.ne.s32.totalorder %s212, %s215
      %p221 = scmp.eq.s32.totalorder %s24, 0
      %p222 = por %p220, %p221
      %p223 = scmp.ne.s32.totalorder %s212, %s215
      %p224 = scmp.eq.s32.totalorder %s29, 3
      %p225 = por %p223, %p224
      %p226 = scmp.ne.s32.totalorder %s215, %s216
      %p227 = scmp.eq.s32.totalorder %s29, 0
      %p228 = por %p226, %p227
      %p229 = scmp.ne.s32.totalorder %s215, %s216
      %p230 = scmp.eq.s32.totalorder %s30, 3
      %p231 = por %p229, %p230
      %p233 = scmp.ne.s32.totalorder %s216, %s232
      %p234 = scmp.eq.s32.totalorder %s30, 0
      %p235 = por %p233, %p234
      %p236 = scmp.le.s32.totalorder 1, %s24
      %p237 = scmp.lt.s32.totalorder %s24, 5
      %p238 = pnand %p236, %p237
      %p239 = pneg %p238
      // Predicated region
      $region9: #{tpu_custom_call.1} parent=5 // pred_check
        _
      $region10: #{tpu_custom_call.1} parent=5 // pred_check_branch
        %241 = sbr.rel (%p238) target = $region12
      $region11: #{tpu_custom_call.1} parent=5 // pred_region
        %s242 = ssub.s32 %s24, 1
        // Predicated region
        $region13: #{tpu_custom_call.1} parent=11 // pred_check
          %p243 = pneg %p137
        $region14: #{tpu_custom_call.1} parent=11 // pred_check_branch
          %245 = sbr.rel (%p243) target = $region16
        $region15: #{tpu_custom_call.1} parent=11 // pred_region
          %s247 = ssub.s32 512, 512
          %248 = vsyncadd [#allocation12], %s247
          %s249 = sshll.u32 [#allocation11], 4
          %s250 = int_to_ptr.vmem [resolvable:$true] %s249
          %255 = dma.hbm_to_vmem [thread:$0]  %s3, 512, %s250, [#allocation12], 64, 64, 4
        $region16: #{tpu_custom_call.1} parent=11 // pred_fallthru
          _
        // Predicated region
        $region17: #{tpu_custom_call.1} parent=11 // pred_check
          %p256 = pneg %p158
        $region18: #{tpu_custom_call.1} parent=11 // pred_check_branch
          %258 = sbr.rel (%p256) target = $region20
        $region19: #{tpu_custom_call.1} parent=11 // pred_region
          %s260 = ssub.s32 512, 512
          %261 = vsyncadd [#allocation12], %s260
          %s262 = sshll.u32 [#allocation13], 4
          %s263 = int_to_ptr.vmem [resolvable:$true] %s262
          %268 = dma.hbm_to_vmem [thread:$0]  %s4, 512, %s263, [#allocation12], 64, 64, 4
        $region20: #{tpu_custom_call.1} parent=11 // pred_fallthru
          _
        // Predicated region
        $region21: #{tpu_custom_call.1} parent=11 // pred_check
          %p269 = pneg %p179
        $region22: #{tpu_custom_call.1} parent=11 // pred_check_branch
          %271 = sbr.rel (%p269) target = $region24
        $region23: #{tpu_custom_call.1} parent=11 // pred_region
          %s273 = ssub.s32 512, 512
          %274 = vsyncadd [#allocation15], %s273
          %s275 = sshll.u32 [#allocation14], 4
          %s276 = int_to_ptr.vmem [resolvable:$true] %s275
          %281 = dma.hbm_to_vmem [thread:$0]  %s5, 512, %s276, [#allocation15], 64, 64, 4
        $region24: #{tpu_custom_call.1} parent=11 // pred_fallthru
          _
        // Predicated region
        $region25: #{tpu_custom_call.1} parent=11 // pred_check
          %p282 = pneg %p200
        $region26: #{tpu_custom_call.1} parent=11 // pred_check_branch
          %284 = sbr.rel (%p282) target = $region28
        $region27: #{tpu_custom_call.1} parent=11 // pred_region
          %s286 = ssub.s32 512, 512
          %287 = vsyncadd [#allocation15], %s286
          %s288 = sshll.u32 [#allocation16], 4
          %s289 = int_to_ptr.vmem [resolvable:$true] %s288
          %294 = dma.hbm_to_vmem [thread:$0]  %s6, 512, %s289, [#allocation15], 64, 64, 4
        $region28: #{tpu_custom_call.1} parent=11 // pred_fallthru
          _
      $region12: #{tpu_custom_call.1} parent=5 // pred_fallthru
        _
      %p295 = scmp.lt.s32.totalorder %s24, 4
      // Predicated region
      $region29: #{tpu_custom_call.1} parent=5 // pred_check
        %p296 = pneg %p295
      $region30: #{tpu_custom_call.1} parent=5 // pred_check_branch
        %298 = sbr.rel (%p296) target = $region32
      $region31: #{tpu_custom_call.1} parent=5 // pred_region
        // Predicated region
        $region33: #{tpu_custom_call.1} parent=31 // pred_check
          %p299 = pneg %p58
        $region34: #{tpu_custom_call.1} parent=31 // pred_check_branch
          %301 = sbr.rel (%p299) target = $region36
        $region35: #{tpu_custom_call.1} parent=31 // pred_region
          %s302 = sand.u32 %s48, 1
          %s303 = scalar_lea.sflag [#allocation6], %s302
          %s304 = sand.u32 %s48, 1
          %s305 = smul.addr %s304, 4
          %s306 = scalar_lea.vmem [#allocation5], %s305
          %s308 = ssub.s32 64, 64
          %309 = vsyncadd %s303, %s308
          %s310 = smul.addr %s31, 2
          %s311 = sadd.s32 %s32, %s310
          %s312 = smul.addr %s311, 64
          %s313 = scalar_lea.hbm %s0, %s312
          %s315 = sshll.u32 %s306, 4
          %s316 = int_to_ptr.vmem [resolvable:$true] %s315
          %318 = dma.hbm_to_vmem [thread:$0]  %s313, 64, %s316, %s303
        $region36: #{tpu_custom_call.1} parent=31 // pred_fallthru
          _
        // Predicated region
        $region37: #{tpu_custom_call.1} parent=31 // pred_check
          %p319 = pneg %p84
        $region38: #{tpu_custom_call.1} parent=31 // pred_check_branch
          %321 = sbr.rel (%p319) target = $region40
        $region39: #{tpu_custom_call.1} parent=31 // pred_region
          %s322 = sand.u32 %s24, 1
          %s323 = scalar_lea.sflag [#allocation9], %s322
          %s324 = sand.u32 %s74, 1
          %s325 = smul.addr %s324, 8
          %s326 = scalar_lea.vmem [#allocation8], %s325
          %s328 = ssub.s32 128, 128
          %329 = vsyncadd %s323, %s328
          %s330 = smul.addr %s31, 2
          %s331 = smul.addr %s330, 64
          %s332 = scalar_lea.hbm %s1, %s331
          %s333 = sshll.u32 %s326, 4
          %s334 = int_to_ptr.vmem [resolvable:$true] %s333
          %339 = dma.hbm_to_vmem [thread:$0]  %s332, 128, %s334, %s323, 64, 64, 4
        $region40: #{tpu_custom_call.1} parent=31 // pred_fallthru
          _
        // Predicated region
        $region41: #{tpu_custom_call.1} parent=31 // pred_check
          %p340 = pneg %p110
        $region42: #{tpu_custom_call.1} parent=31 // pred_check_branch
          %342 = sbr.rel (%p340) target = $region44
        $region43: #{tpu_custom_call.1} parent=31 // pred_region
          %s343 = sand.u32 %s24, 1
          %s344 = scalar_lea.sflag [#allocation9], %s343
          %s345 = sand.u32 %s100, 1
          %s346 = smul.addr %s345, 8
          %s347 = scalar_lea.vmem [#allocation10], %s346
          %s349 = ssub.s32 128, 128
          %350 = vsyncadd %s344, %s349
          %s351 = smul.addr %s31, 2
          %s352 = smul.addr %s351, 64
          %s353 = scalar_lea.hbm %s2, %s352
          %s354 = sshll.u32 %s347, 4
          %s355 = int_to_ptr.vmem [resolvable:$true] %s354
          %360 = dma.hbm_to_vmem [thread:$0]  %s353, 128, %s355, %s344, 64, 64, 4
        $region44: #{tpu_custom_call.1} parent=31 // pred_fallthru
          _
      $region32: #{tpu_custom_call.1} parent=5 // pred_fallthru
        _
      %p361 = scmp.le.s32.totalorder 1, %s24
      %p362 = scmp.lt.s32.totalorder %s24, 5
      %p363 = pnand %p361, %p362
      %p364 = pneg %p363
      // Predicated region
      $region45: #{tpu_custom_call.1} parent=5 // pred_check
        _
      $region46: #{tpu_custom_call.1} parent=5 // pred_check_branch
        %366 = sbr.rel (%p363) target = $region48
      $region47: #{tpu_custom_call.1} parent=5 // pred_region
        %s367 = ssub.s32 %s24, 1
        %s368 = sand.u32 %s51, 1
        %s369 = scalar_lea.sflag [#allocation6], %s368
        %s370 = sand.u32 %s51, 1
        %s371 = smul.addr %s370, 4
        %s372 = scalar_lea.vmem [#allocation5], %s371
        // Predicated region
        $region49: #{tpu_custom_call.1} parent=47 // pred_check
          %p373 = pneg %p64
        $region50: #{tpu_custom_call.1} parent=47 // pred_check_branch
          %375 = sbr.rel (%p373) target = $region52
        $region51: #{tpu_custom_call.1} parent=47 // pred_region
          %376 = dma.done %s369, 64
        $region52: #{tpu_custom_call.1} parent=47 // pred_fallthru
          _
        %s377 = sand.u32 %s29, 1
        %s378 = scalar_lea.sflag [#allocation9], %s377
        %s379 = sand.u32 %s77, 1
        %s380 = smul.addr %s379, 8
        %s381 = scalar_lea.vmem [#allocation8], %s380
        // Predicated region
        $region53: #{tpu_custom_call.1} parent=47 // pred_check
          %p382 = pneg %p90
        $region54: #{tpu_custom_call.1} parent=47 // pred_check_branch
          %384 = sbr.rel (%p382) target = $region56
        $region55: #{tpu_custom_call.1} parent=47 // pred_region
          %385 = dma.done %s378, 128
        $region56: #{tpu_custom_call.1} parent=47 // pred_fallthru
          _
        %s386 = sand.u32 %s29, 1
        %s387 = scalar_lea.sflag [#allocation9], %s386
        %s388 = sand.u32 %s103, 1
        %s389 = smul.addr %s388, 8
        %s390 = scalar_lea.vmem [#allocation10], %s389
        // Predicated region
        $region57: #{tpu_custom_call.1} parent=47 // pred_check
          %p391 = pneg %p116
        $region58: #{tpu_custom_call.1} parent=47 // pred_check_branch
          %393 = sbr.rel (%p391) target = $region60
        $region59: #{tpu_custom_call.1} parent=47 // pred_region
          %394 = dma.done %s387, 128
        $region60: #{tpu_custom_call.1} parent=47 // pred_fallthru
          _
        // Predicated region
        $region61: #{tpu_custom_call.1} parent=47 // pred_check
          %p395 = pneg %p137
        $region62: #{tpu_custom_call.1} parent=47 // pred_check_branch
          %397 = sbr.rel (%p395) target = $region64
        $region63: #{tpu_custom_call.1} parent=47 // pred_region
          %398 = dma.done [#allocation12], 512
        $region64: #{tpu_custom_call.1} parent=47 // pred_fallthru
          _
        // Predicated region
        $region65: #{tpu_custom_call.1} parent=47 // pred_check
          %p399 = pneg %p158
        $region66: #{tpu_custom_call.1} parent=47 // pred_check_branch
          %401 = sbr.rel (%p399) target = $region68
        $region67: #{tpu_custom_call.1} parent=47 // pred_region
          %402 = dma.done [#allocation12], 512
        $region68: #{tpu_custom_call.1} parent=47 // pred_fallthru
          _
        // Predicated region
        $region69: #{tpu_custom_call.1} parent=47 // pred_check
          %p403 = pneg %p179
        $region70: #{tpu_custom_call.1} parent=47 // pred_check_branch
          %405 = sbr.rel (%p403) target = $region72
        $region71: #{tpu_custom_call.1} parent=47 // pred_region
          %406 = dma.done [#allocation15], 512
        $region72: #{tpu_custom_call.1} parent=47 // pred_fallthru
          _
        // Predicated region
        $region73: #{tpu_custom_call.1} parent=47 // pred_check
          %p407 = pneg %p200
        $region74: #{tpu_custom_call.1} parent=47 // pred_check_branch
          %409 = sbr.rel (%p407) target = $region76
        $region75: #{tpu_custom_call.1} parent=47 // pred_region
          %410 = dma.done [#allocation15], 512
        $region76: #{tpu_custom_call.1} parent=47 // pred_fallthru
          _
        %s411 = sand.u32 %s51, 1
        %s412 = scalar_lea.sflag [#allocation6], %s411
        %s413 = sand.u32 %s51, 1
        %s414 = smul.addr %s413, 4
        %s415 = scalar_lea.vmem [#allocation5], %s414
        %p416 = pneg %p64
        %p417 = pneg %p61
        %s418 = sand.u32 %s29, 1
        %s419 = scalar_lea.sflag [#allocation9], %s418
        %s420 = sand.u32 %s77, 1
        %s421 = smul.addr %s420, 8
        %s422 = scalar_lea.vmem [#allocation8], %s421
        %p423 = pneg %p90
        %p424 = pneg %p87
        %s425 = sand.u32 %s29, 1
        %s426 = scalar_lea.sflag [#allocation9], %s425
        %s427 = sand.u32 %s103, 1
        %s428 = smul.addr %s427, 8
        %s429 = scalar_lea.vmem [#allocation10], %s428
        %p430 = pneg %p116
        %p431 = pneg %p113
        %p432 = pneg %p137
        %p433 = pneg %p134
        %p434 = pneg %p158
        %p435 = pneg %p155
        %p436 = pneg %p179
        %p437 = pneg %p176
        %p438 = pneg %p200
        %p439 = pneg %p197
        %p440 = pneg %p228
        %p441 = pneg %p225
        %s442 = sand.u32 %s215, 1
        %s443 = scalar_lea.sflag [#allocation7], %s442
        %s444 = sand.u32 %s215, 1
        %s445 = smul.addr %s444, 8
        %s446 = scalar_lea.vmem [#allocation17], %s445
        %p448 = scmp.eq.s32.totalorder %s34, 0
        // Predicated region
        $region77: #{tpu_custom_call.1} parent=47 // pred_check
          %p449 = pneg %p448
        $region78: #{tpu_custom_call.1} parent=47 // pred_check_branch
          %451 = sbr.rel (%p449) target = $region80
        $region79: #{tpu_custom_call.1} parent=47 // pred_region
          %v452 = vld [vmem:[%s381] sm:$0xf]
          %v453 = vld [vmem:[%s381 + $0x4] sm:$0xf]
          %v454 = vld [vmem:[#allocation13] sm:$0xf]
          %v455 = vld [vmem:[#allocation13 + $0x4] sm:$0xf]
          %v456 = vld [vmem:[#allocation13 + $0x8] sm:$0xf]
          %v457 = vld [vmem:[#allocation13 + $0xc] sm:$0xf]
          %v458 = vld [vmem:[#allocation13 + $0x10] sm:$0xf]
          %v459 = vld [vmem:[#allocation13 + $0x14] sm:$0xf]
          %v460 = vld [vmem:[#allocation13 + $0x18] sm:$0xf]
          %v461 = vld [vmem:[#allocation13 + $0x1c] sm:$0xf]
          %v464 = vunpack.c.l.b16 %v452
          %v465 = vunpack.c.l.b16 %v453
          %v466 = vpack.c.b16 %v465, %v464
          %v475 = vunpack.c.l.b16 %v454
          %v476 = vunpack.c.l.b16 %v455
          %v477 = vunpack.c.l.b16 %v456
          %v478 = vunpack.c.l.b16 %v457
          %v479 = vunpack.c.l.b16 %v458
          %v480 = vunpack.c.l.b16 %v459
          %v481 = vunpack.c.l.b16 %v460
          %v482 = vunpack.c.l.b16 %v461
          %v483 = vpack.c.b16 %v476, %v475
          %v484 = vpack.c.b16 %v478, %v477
          %v485 = vpack.c.b16 %v480, %v479
          %v486 = vpack.c.b16 %v482, %v481
          %vm491 = vcmask 523264
          %v493 = vsel %vm491, %v466, 0
          %495 = vmatprep.subr.bf16.mxu0 0
          %496 = vmatpush1.bf16.msra.mxu0 0
          %497 = vmatprep.subr.bf16.mxu0 0
          %498 = vmatpush1.bf16.msra.mxu0 0
          %499 = vmatprep.subr.bf16.mxu0 0
          %500 = vmatpush1.bf16.msra.mxu0 0
          %501 = vmatprep.subr.bf16.mxu0 0
          %502 = vmatpush1.bf16.msra.mxu0 0
          %503 = vmatprep.subr.bf16.mxu0 0
          %504 = vmatpush1.bf16.msra.mxu0 %v486
          %505 = vmatprep.subr.bf16.mxu0 0
          %506 = vmatpush1.bf16.msra.mxu0 %v485
          %507 = vmatprep.subr.bf16.mxu0 0
          %508 = vmatpush1.bf16.msra.mxu0 %v484
          %509 = vmatprep.subr.bf16.mxu0 0
          %510 = vmatpush1.bf16.msra.mxu0 %v483
          %511 = vmatprep.subr.bf16.mxu0 0
          %512 = vmatpush2.bf16.msra.mxu0 0
          %513 = vmatprep.subr.bf16.mxu0 0
          %514 = vmatpush2.bf16.msra.mxu0 0
          %515 = vmatprep.subr.bf16.mxu0 0
          %516 = vmatpush2.bf16.msra.mxu0 0
          %517 = vmatprep.subr.bf16.mxu0 0
          %518 = vmatpush2.bf16.msra.mxu0 0
          %519 = vmatprep.subr.bf16.mxu0 0
          %520 = vmatpush2.bf16.msra.mxu0 0
          %521 = vmatprep.subr.bf16.mxu0 0
          %522 = vmatpush2.bf16.msra.mxu0 0
          %523 = vmatprep.subr.bf16.mxu0 0
          %524 = vmatpush2.bf16.msra.mxu0 0
          %525 = vmatprep.subr.bf16.mxu0 0
          %526 = vmatpush2.bf16.msra.mxu0 0
          %527 = vmatprep.mubr.bf16.mxu0 0
          %528 = vmatmul.mubr.bf16.gmra.mxu0 %v493
          %v529 = vpop.f32.mrf.mxu0
          %v530 = vadd.f32 0.0, %v529
          %v531 = vpop.f32.mrf.mxu0
          %v532 = vpop.f32.mrf.mxu0
          %v533 = vadd.f32 0.0, %v532
          %v534 = vpop.f32.mrf.mxu0
          %535 = vdwg.mxu0
          %v536 = vpack.c.bf16 %v533, %v530
          %v538 = vunpack.c.l.b16 %v536
          %v539 = vunpack.c.h.b16 %v536
          %v540 = vpack.c.b16 %v538, %v538
          %v541 = vpack.c.b16 %v539, %v539
          %vm544 = vcmask 519168
          %545 = vst.msk [vmem:[#allocation2] sm:$0xf] %vm544, %v540
          %546 = vst.msk [vmem:[#allocation2 + $0x4] sm:$0xf] %vm544, %v541
          %v547 = vld [vmem:[%s390] sm:$0xf]
          %v548 = vld [vmem:[%s390 + $0x4] sm:$0xf]
          %v549 = vld [vmem:[#allocation14] sm:$0xf]
          %v550 = vld [vmem:[#allocation14 + $0x4] sm:$0xf]
          %v551 = vld [vmem:[#allocation14 + $0x8] sm:$0xf]
          %v552 = vld [vmem:[#allocation14 + $0xc] sm:$0xf]
          %v553 = vld [vmem:[#allocation14 + $0x10] sm:$0xf]
          %v554 = vld [vmem:[#allocation14 + $0x14] sm:$0xf]
          %v555 = vld [vmem:[#allocation14 + $0x18] sm:$0xf]
          %v556 = vld [vmem:[#allocation14 + $0x1c] sm:$0xf]
          %v559 = vunpack.c.l.b16 %v547
          %v560 = vunpack.c.l.b16 %v548
          %v561 = vpack.c.b16 %v560, %v559
          %v570 = vunpack.c.l.b16 %v549
          %v571 = vunpack.c.l.b16 %v550
          %v572 = vunpack.c.l.b16 %v551
          %v573 = vunpack.c.l.b16 %v552
          %v574 = vunpack.c.l.b16 %v553
          %v575 = vunpack.c.l.b16 %v554
          %v576 = vunpack.c.l.b16 %v555
          %v577 = vunpack.c.l.b16 %v556
          %v578 = vpack.c.b16 %v571, %v570
          %v579 = vpack.c.b16 %v573, %v572
          %v580 = vpack.c.b16 %v575, %v574
          %v581 = vpack.c.b16 %v577, %v576
          %v587 = vsel %vm491, %v561, 0
          %589 = vmatprep.subr.bf16.mxu0 0
          %590 = vmatpush1.bf16.msra.mxu0 0
          %591 = vmatprep.subr.bf16.mxu0 0
          %592 = vmatpush1.bf16.msra.mxu0 0
          %593 = vmatprep.subr.bf16.mxu0 0
          %594 = vmatpush1.bf16.msra.mxu0 0
          %595 = vmatprep.subr.bf16.mxu0 0
          %596 = vmatpush1.bf16.msra.mxu0 0
          %597 = vmatprep.subr.bf16.mxu0 0
          %598 = vmatpush1.bf16.msra.mxu0 %v581
          %599 = vmatprep.subr.bf16.mxu0 0
          %600 = vmatpush1.bf16.msra.mxu0 %v580
          %601 = vmatprep.subr.bf16.mxu0 0
          %602 = vmatpush1.bf16.msra.mxu0 %v579
          %603 = vmatprep.subr.bf16.mxu0 0
          %604 = vmatpush1.bf16.msra.mxu0 %v578
          %605 = vmatprep.subr.bf16.mxu0 0
          %606 = vmatpush2.bf16.msra.mxu0 0
          %607 = vmatprep.subr.bf16.mxu0 0
          %608 = vmatpush2.bf16.msra.mxu0 0
          %609 = vmatprep.subr.bf16.mxu0 0
          %610 = vmatpush2.bf16.msra.mxu0 0
          %611 = vmatprep.subr.bf16.mxu0 0
          %612 = vmatpush2.bf16.msra.mxu0 0
          %613 = vmatprep.subr.bf16.mxu0 0
          %614 = vmatpush2.bf16.msra.mxu0 0
          %615 = vmatprep.subr.bf16.mxu0 0
          %616 = vmatpush2.bf16.msra.mxu0 0
          %617 = vmatprep.subr.bf16.mxu0 0
          %618 = vmatpush2.bf16.msra.mxu0 0
          %619 = vmatprep.subr.bf16.mxu0 0
          %620 = vmatpush2.bf16.msra.mxu0 0
          %621 = vmatprep.mubr.bf16.mxu0 0
          %622 = vmatmul.mubr.bf16.gmra.mxu0 %v587
          %v623 = vpop.f32.mrf.mxu0
          %v624 = vadd.f32 0.0, %v623
          %v625 = vpop.f32.mrf.mxu0
          %v626 = vpop.f32.mrf.mxu0
          %v627 = vadd.f32 0.0, %v626
          %v628 = vpop.f32.mrf.mxu0
          %629 = vdwg.mxu0
          %v630 = vpack.c.bf16 %v627, %v624
          %v632 = vunpack.c.l.b16 %v630
          %v633 = vunpack.c.h.b16 %v630
          %v634 = vpack.c.b16 %v632, %v632
          %v635 = vpack.c.b16 %v633, %v633
          %638 = vst.msk [vmem:[#allocation3] sm:$0xf] %vm544, %v634
          %639 = vst.msk [vmem:[#allocation3 + $0x4] sm:$0xf] %vm544, %v635
        $region80: #{tpu_custom_call.1} parent=47 // pred_fallthru
          _
        %v640 = vld [vmem:[%s372] sm:$0xf]
        %v641 = vld [vmem:[#allocation11] sm:$0xf]
        %v642 = vld [vmem:[#allocation11 + $0x4] sm:$0xf]
        %v643 = vld [vmem:[#allocation11 + $0x8] sm:$0xf]
        %v644 = vld [vmem:[#allocation11 + $0xc] sm:$0xf]
        %v645 = vld [vmem:[#allocation11 + $0x10] sm:$0xf]
        %v646 = vld [vmem:[#allocation11 + $0x14] sm:$0xf]
        %v647 = vld [vmem:[#allocation11 + $0x18] sm:$0xf]
        %v648 = vld [vmem:[#allocation11 + $0x1c] sm:$0xf]
        %v657 = vunpack.c.l.b16 %v641
        %v658 = vunpack.c.l.b16 %v642
        %v659 = vunpack.c.l.b16 %v643
        %v660 = vunpack.c.l.b16 %v644
        %v661 = vunpack.c.l.b16 %v645
        %v662 = vunpack.c.l.b16 %v646
        %v663 = vunpack.c.l.b16 %v647
        %v664 = vunpack.c.l.b16 %v648
        %v665 = vpack.c.b16 %v658, %v657
        %v666 = vpack.c.b16 %v660, %v659
        %v667 = vpack.c.b16 %v662, %v661
        %v668 = vpack.c.b16 %v664, %v663
        %vm673 = vcmask 523264
        %v675 = vsel %vm673, %v640, 0
        %677 = vmatprep.subr.bf16.mxu0 0
        %678 = vmatpush1.bf16.msra.mxu0 0
        %679 = vmatprep.subr.bf16.mxu0 0
        %680 = vmatpush1.bf16.msra.mxu0 0
        %681 = vmatprep.subr.bf16.mxu0 0
        %682 = vmatpush1.bf16.msra.mxu0 0
        %683 = vmatprep.subr.bf16.mxu0 0
        %684 = vmatpush1.bf16.msra.mxu0 0
        %685 = vmatprep.subr.bf16.mxu0 0
        %686 = vmatpush1.bf16.msra.mxu0 %v668
        %687 = vmatprep.subr.bf16.mxu0 0
        %688 = vmatpush1.bf16.msra.mxu0 %v667
        %689 = vmatprep.subr.bf16.mxu0 0
        %690 = vmatpush1.bf16.msra.mxu0 %v666
        %691 = vmatprep.subr.bf16.mxu0 0
        %692 = vmatpush1.bf16.msra.mxu0 %v665
        %693 = vmatprep.subr.bf16.mxu0 0
        %694 = vmatpush2.bf16.msra.mxu0 0
        %695 = vmatprep.subr.bf16.mxu0 0
        %696 = vmatpush2.bf16.msra.mxu0 0
        %697 = vmatprep.subr.bf16.mxu0 0
        %698 = vmatpush2.bf16.msra.mxu0 0
        %699 = vmatprep.subr.bf16.mxu0 0
        %700 = vmatpush2.bf16.msra.mxu0 0
        %701 = vmatprep.subr.bf16.mxu0 0
        %702 = vmatpush2.bf16.msra.mxu0 0
        %703 = vmatprep.subr.bf16.mxu0 0
        %704 = vmatpush2.bf16.msra.mxu0 0
        %705 = vmatprep.subr.bf16.mxu0 0
        %706 = vmatpush2.bf16.msra.mxu0 0
        %707 = vmatprep.subr.bf16.mxu0 0
        %708 = vmatpush2.bf16.msra.mxu0 0
        %709 = vmatprep.mubr.bf16.mxu0 0
        %710 = vmatmul.mubr.bf16.gmra.mxu0 %v675
        %v711 = vpop.f32.mrf.mxu0
        %v712 = vadd.f32 0.0, %v711
        %v713 = vpop.f32.mrf.mxu0
        %v714 = vpop.f32.mrf.mxu0
        %v715 = vpop.f32.mrf.mxu0
        %716 = vdwg.mxu0
        %v717 = vmul.f32 %v712, 0.25
        %v718 = vpack.c.bf16 %v717, %v717
        %v719 = vld [vmem:[#allocation2] sm:$0xf]
        %v720 = vld [vmem:[#allocation2 + $0x4] sm:$0xf]
        %v723 = vunpack.c.l.b16 %v719
        %v724 = vunpack.c.l.b16 %v720
        %v725 = vpack.c.b16 %v724, %v723
        %vm726 = vcmask 130048
        %v728 = vsel %vm726, %v718, 0
        %v731 = vsel %vm726, %v725, 0
        %733 = vmatprep.subr.bf16.mxu0 0
        %734 = vmatpush1.bf16.xpose.msra.mxu0 0
        %735 = vmatprep.subr.bf16.mxu0 0
        %736 = vmatpush1.bf16.xpose.msra.mxu0 0
        %737 = vmatprep.subr.bf16.mxu0 0
        %738 = vmatpush1.bf16.xpose.msra.mxu0 0
        %739 = vmatprep.subr.bf16.mxu0 0
        %740 = vmatpush1.bf16.xpose.msra.mxu0 0
        %741 = vmatprep.subr.bf16.mxu0 0
        %742 = vmatpush1.bf16.xpose.msra.mxu0 0
        %743 = vmatprep.subr.bf16.mxu0 0
        %744 = vmatpush1.bf16.xpose.msra.mxu0 0
        %745 = vmatprep.subr.bf16.mxu0 0
        %746 = vmatpush1.bf16.xpose.msra.mxu0 0
        %747 = vmatprep.subr.bf16.mxu0 0
        %748 = vmatpush1.bf16.xpose.msra.mxu0 %v731
        %749 = vmatprep.subr.bf16.mxu0 0
        %750 = vmatpush2.bf16.xpose.msra.mxu0 0
        %751 = vmatprep.subr.bf16.mxu0 0
        %752 = vmatpush2.bf16.xpose.msra.mxu0 0
        %753 = vmatprep.subr.bf16.mxu0 0
        %754 = vmatpush2.bf16.xpose.msra.mxu0 0
        %755 = vmatprep.subr.bf16.mxu0 0
        %756 = vmatpush2.bf16.xpose.msra.mxu0 0
        %757 = vmatprep.subr.bf16.mxu0 0
        %758 = vmatpush2.bf16.xpose.msra.mxu0 0
        %759 = vmatprep.subr.bf16.mxu0 0
        %760 = vmatpush2.bf16.xpose.msra.mxu0 0
        %761 = vmatprep.subr.bf16.mxu0 0
        %762 = vmatpush2.bf16.xpose.msra.mxu0 0
        %763 = vmatprep.subr.bf16.mxu0 0
        %764 = vmatpush2.bf16.xpose.msra.mxu0 0
        %765 = vmatprep.mubr.bf16.mxu0 0
        %766 = vmatmul.mubr.bf16.gmra.mxu0 %v728
        %v767 = vpop.f32.mrf.mxu0
        %v768 = vadd.f32 0.0, %v767
        %v769 = vpop.f32.mrf.mxu0
        %v770 = vpop.f32.mrf.mxu0
        %v771 = vpop.f32.mrf.mxu0
        %772 = vdwg.mxu0
        %v773 = vsel %vm726, %v768, -inf
        %774 = vmax.xlane.f32.xlu0 %v773
        %v775 = vpop.xlane.xlu0 %774
        %v776 = vsub.f32 %v768, %v775
        %v777 = vmul.f32 %v776, 1.442695
        %v778 = vpow.pop %v777
        %v779 = vsel %vm726, %v778, 0.0
        %780 = vadd.xlane.f32.xlu0 %v779
        %v781 = vpop.xlane.xlu0 %780
        %v782 = vld [vmem:[#allocation3] sm:$0xf]
        %v783 = vld [vmem:[#allocation3 + $0x4] sm:$0xf]
        %v784 = vpack.c.bf16 %v778, %v778
        %v787 = vunpack.c.l.b16 %v782
        %v788 = vunpack.c.l.b16 %v783
        %v789 = vpack.c.b16 %v788, %v787
        %v792 = vsel %vm726, %v784, 0
        %794 = vmatprep.subr.bf16.mxu0 0
        %795 = vmatpush1.bf16.msra.mxu0 0
        %796 = vmatprep.subr.bf16.mxu0 0
        %797 = vmatpush1.bf16.msra.mxu0 0
        %798 = vmatprep.subr.bf16.mxu0 0
        %799 = vmatpush1.bf16.msra.mxu0 0
        %800 = vmatprep.subr.bf16.mxu0 0
        %801 = vmatpush1.bf16.msra.mxu0 0
        %802 = vmatprep.subr.bf16.mxu0 0
        %803 = vmatpush1.bf16.msra.mxu0 0
        %804 = vmatprep.subr.bf16.mxu0 0
        %805 = vmatpush1.bf16.msra.mxu0 0
        %806 = vmatprep.subr.bf16.mxu0 0
        %807 = vmatpush1.bf16.msra.mxu0 0
        %808 = vmatprep.subr.bf16.mxu0 0
        %809 = vmatpush1.bf16.msra.mxu0 %v789
        %810 = vmatprep.subr.bf16.mxu0 0
        %811 = vmatpush2.bf16.msra.mxu0 0
        %812 = vmatprep.subr.bf16.mxu0 0
        %813 = vmatpush2.bf16.msra.mxu0 0
        %814 = vmatprep.subr.bf16.mxu0 0
        %815 = vmatpush2.bf16.msra.mxu0 0
        %816 = vmatprep.subr.bf16.mxu0 0
        %817 = vmatpush2.bf16.msra.mxu0 0
        %818 = vmatprep.subr.bf16.mxu0 0
        %819 = vmatpush2.bf16.msra.mxu0 0
        %820 = vmatprep.subr.bf16.mxu0 0
        %821 = vmatpush2.bf16.msra.mxu0 0
        %822 = vmatprep.subr.bf16.mxu0 0
        %823 = vmatpush2.bf16.msra.mxu0 0
        %824 = vmatprep.subr.bf16.mxu0 0
        %825 = vmatpush2.bf16.msra.mxu0 0
        %826 = vmatprep.mubr.bf16.mxu0 0
        %827 = vmatmul.mubr.bf16.gmra.mxu0 %v792
        %v828 = vpop.f32.mrf.mxu0
        %v829 = vadd.f32 0.0, %v828
        %v830 = vpop.f32.mrf.mxu0
        %v831 = vpop.f32.mrf.mxu0
        %v832 = vpop.f32.mrf.mxu0
        %833 = vdwg.mxu0
        %v834 = vrcp.pop %v781
        %v835 = vmul.f32 %v829, %v834
        %v836 = vpack.c.bf16 %v835, %v835
        %vm837 = vcmask 125952
        %838 = vst.msk [vmem:[#allocation4] sm:$0xf] %vm837, %v836
        %v839 = vld [vmem:[#allocation2] sm:$0xf]
        %v840 = vld [vmem:[#allocation2 + $0x4] sm:$0xf]
        %842 = vrot.lane.b32.xlu0 %v718, 112
        %v843 = vpop.permute.xlu0 %842
        %v846 = vunpack.c.l.b16 %v839
        %v847 = vunpack.c.l.b16 %v840
        %v848 = vpack.c.b16 %v847, %v846
        %849 = vrot.lane.b32.xlu0 %v848, 112
        %v850 = vpop.permute.xlu0 %849
        %v852 = vsel %vm726, %v843, 0
        %v855 = vsel %vm726, %v850, 0
        %857 = vmatprep.subr.bf16.mxu0 0
        %858 = vmatpush1.bf16.xpose.msra.mxu0 0
        %859 = vmatprep.subr.bf16.mxu0 0
        %860 = vmatpush1.bf16.xpose.msra.mxu0 0
        %861 = vmatprep.subr.bf16.mxu0 0
        %862 = vmatpush1.bf16.xpose.msra.mxu0 0
        %863 = vmatprep.subr.bf16.mxu0 0
        %864 = vmatpush1.bf16.xpose.msra.mxu0 0
        %865 = vmatprep.subr.bf16.mxu0 0
        %866 = vmatpush1.bf16.xpose.msra.mxu0 0
        %867 = vmatprep.subr.bf16.mxu0 0
        %868 = vmatpush1.bf16.xpose.msra.mxu0 0
        %869 = vmatprep.subr.bf16.mxu0 0
        %870 = vmatpush1.bf16.xpose.msra.mxu0 0
        %871 = vmatprep.subr.bf16.mxu0 0
        %872 = vmatpush1.bf16.xpose.msra.mxu0 %v855
        %873 = vmatprep.subr.bf16.mxu0 0
        %874 = vmatpush2.bf16.xpose.msra.mxu0 0
        %875 = vmatprep.subr.bf16.mxu0 0
        %876 = vmatpush2.bf16.xpose.msra.mxu0 0
        %877 = vmatprep.subr.bf16.mxu0 0
        %878 = vmatpush2.bf16.xpose.msra.mxu0 0
        %879 = vmatprep.subr.bf16.mxu0 0
        %880 = vmatpush2.bf16.xpose.msra.mxu0 0
        %881 = vmatprep.subr.bf16.mxu0 0
        %882 = vmatpush2.bf16.xpose.msra.mxu0 0
        %883 = vmatprep.subr.bf16.mxu0 0
        %884 = vmatpush2.bf16.xpose.msra.mxu0 0
        %885 = vmatprep.subr.bf16.mxu0 0
        %886 = vmatpush2.bf16.xpose.msra.mxu0 0
        %887 = vmatprep.subr.bf16.mxu0 0
        %888 = vmatpush2.bf16.xpose.msra.mxu0 0
        %889 = vmatprep.mubr.bf16.mxu0 0
        %890 = vmatmul.mubr.bf16.gmra.mxu0 %v852
        %v891 = vpop.f32.mrf.mxu0
        %v892 = vadd.f32 0.0, %v891
        %v893 = vpop.f32.mrf.mxu0
        %v894 = vpop.f32.mrf.mxu0
        %v895 = vpop.f32.mrf.mxu0
        %896 = vdwg.mxu0
        %v897 = vsel %vm726, %v892, -inf
        %898 = vmax.xlane.f32.xlu0 %v897
        %v899 = vpop.xlane.xlu0 %898
        %v900 = vsub.f32 %v892, %v899
        %v901 = vmul.f32 %v900, 1.442695
        %v902 = vpow.pop %v901
        %v903 = vsel %vm726, %v902, 0.0
        %904 = vadd.xlane.f32.xlu0 %v903
        %v905 = vpop.xlane.xlu0 %904
        %v906 = vld [vmem:[#allocation3] sm:$0xf]
        %v907 = vld [vmem:[#allocation3 + $0x4] sm:$0xf]
        %v908 = vpack.c.bf16 %v902, %v902
        %v911 = vunpack.c.l.b16 %v906
        %v912 = vunpack.c.l.b16 %v907
        %v913 = vpack.c.b16 %v912, %v911
        %914 = vrot.lane.b32.xlu0 %v913, 112
        %v915 = vpop.permute.xlu0 %914
        %v918 = vsel %vm726, %v908, 0
        %920 = vmatprep.subr.bf16.mxu0 0
        %921 = vmatpush1.bf16.msra.mxu0 0
        %922 = vmatprep.subr.bf16.mxu0 0
        %923 = vmatpush1.bf16.msra.mxu0 0
        %924 = vmatprep.subr.bf16.mxu0 0
        %925 = vmatpush1.bf16.msra.mxu0 0
        %926 = vmatprep.subr.bf16.mxu0 0
        %927 = vmatpush1.bf16.msra.mxu0 0
        %928 = vmatprep.subr.bf16.mxu0 0
        %929 = vmatpush1.bf16.msra.mxu0 0
        %930 = vmatprep.subr.bf16.mxu0 0
        %931 = vmatpush1.bf16.msra.mxu0 0
        %932 = vmatprep.subr.bf16.mxu0 0
        %933 = vmatpush1.bf16.msra.mxu0 0
        %934 = vmatprep.subr.bf16.mxu0 0
        %935 = vmatpush1.bf16.msra.mxu0 %v915
        %936 = vmatprep.subr.bf16.mxu0 0
        %937 = vmatpush2.bf16.msra.mxu0 0
        %938 = vmatprep.subr.bf16.mxu0 0
        %939 = vmatpush2.bf16.msra.mxu0 0
        %940 = vmatprep.subr.bf16.mxu0 0
        %941 = vmatpush2.bf16.msra.mxu0 0
        %942 = vmatprep.subr.bf16.mxu0 0
        %943 = vmatpush2.bf16.msra.mxu0 0
        %944 = vmatprep.subr.bf16.mxu0 0
        %945 = vmatpush2.bf16.msra.mxu0 0
        %946 = vmatprep.subr.bf16.mxu0 0
        %947 = vmatpush2.bf16.msra.mxu0 0
        %948 = vmatprep.subr.bf16.mxu0 0
        %949 = vmatpush2.bf16.msra.mxu0 0
        %950 = vmatprep.subr.bf16.mxu0 0
        %951 = vmatpush2.bf16.msra.mxu0 0
        %952 = vmatprep.mubr.bf16.mxu0 0
        %953 = vmatmul.mubr.bf16.gmra.mxu0 %v918
        %v954 = vpop.f32.mrf.mxu0
        %v955 = vadd.f32 0.0, %v954
        %v956 = vpop.f32.mrf.mxu0
        %v957 = vpop.f32.mrf.mxu0
        %v958 = vpop.f32.mrf.mxu0
        %959 = vdwg.mxu0
        %v960 = vrcp.pop %v905
        %v961 = vmul.f32 %v955, %v960
        %v962 = vpack.c.bf16 %v961, %v961
        %v964 = vunpack.c.l.b16 %v962
        %v965 = vpack.c.b16 %v964, %v964
        %966 = vrot.lane.b32.xlu0 %v965, 16
        %v967 = vpop.permute.xlu0 %966
        %vm969 = vcmask 257152
        %970 = vst.msk [vmem:[#allocation4] sm:$0xf] %vm969, %v967
        %v971 = vld [vmem:[#allocation2] sm:$0xf]
        %v972 = vld [vmem:[#allocation2 + $0x4] sm:$0xf]
        %973 = vrot.lane.b32.xlu0 %v718, 96
        %v974 = vpop.permute.xlu0 %973
        %v977 = vunpack.c.l.b16 %v971
        %v978 = vunpack.c.l.b16 %v972
        %v979 = vpack.c.b16 %v978, %v977
        %980 = vrot.lane.b32.xlu0 %v979, 96
        %v981 = vpop.permute.xlu0 %980
        %v983 = vsel %vm726, %v974, 0
        %v986 = vsel %vm726, %v981, 0
        %988 = vmatprep.subr.bf16.mxu0 0
        %989 = vmatpush1.bf16.xpose.msra.mxu0 0
        %990 = vmatprep.subr.bf16.mxu0 0
        %991 = vmatpush1.bf16.xpose.msra.mxu0 0
        %992 = vmatprep.subr.bf16.mxu0 0
        %993 = vmatpush1.bf16.xpose.msra.mxu0 0
        %994 = vmatprep.subr.bf16.mxu0 0
        %995 = vmatpush1.bf16.xpose.msra.mxu0 0
        %996 = vmatprep.subr.bf16.mxu0 0
        %997 = vmatpush1.bf16.xpose.msra.mxu0 0
        %998 = vmatprep.subr.bf16.mxu0 0
        %999 = vmatpush1.bf16.xpose.msra.mxu0 0
        %1000 = vmatprep.subr.bf16.mxu0 0
        %1001 = vmatpush1.bf16.xpose.msra.mxu0 0
        %1002 = vmatprep.subr.bf16.mxu0 0
        %1003 = vmatpush1.bf16.xpose.msra.mxu0 %v986
        %1004 = vmatprep.subr.bf16.mxu0 0
        %1005 = vmatpush2.bf16.xpose.msra.mxu0 0
        %1006 = vmatprep.subr.bf16.mxu0 0
        %1007 = vmatpush2.bf16.xpose.msra.mxu0 0
        %1008 = vmatprep.subr.bf16.mxu0 0
        %1009 = vmatpush2.bf16.xpose.msra.mxu0 0
        %1010 = vmatprep.subr.bf16.mxu0 0
        %1011 = vmatpush2.bf16.xpose.msra.mxu0 0
        %1012 = vmatprep.subr.bf16.mxu0 0
        %1013 = vmatpush2.bf16.xpose.msra.mxu0 0
        %1014 = vmatprep.subr.bf16.mxu0 0
        %1015 = vmatpush2.bf16.xpose.msra.mxu0 0
        %1016 = vmatprep.subr.bf16.mxu0 0
        %1017 = vmatpush2.bf16.xpose.msra.mxu0 0
        %1018 = vmatprep.subr.bf16.mxu0 0
        %1019 = vmatpush2.bf16.xpose.msra.mxu0 0
        %1020 = vmatprep.mubr.bf16.mxu0 0
        %1021 = vmatmul.mubr.bf16.gmra.mxu0 %v983
        %v1022 = vpop.f32.mrf.mxu0
        %v1023 = vadd.f32 0.0, %v1022
        %v1024 = vpop.f32.mrf.mxu0
        %v1025 = vpop.f32.mrf.mxu0
        %v1026 = vpop.f32.mrf.mxu0
        %1027 = vdwg.mxu0
        %v1028 = vsel %vm726, %v1023, -inf
        %1029 = vmax.xlane.f32.xlu0 %v1028
        %v1030 = vpop.xlane.xlu0 %1029
        %v1031 = vsub.f32 %v1023, %v1030
        %v1032 = vmul.f32 %v1031, 1.442695
        %v1033 = vpow.pop %v1032
        %v1034 = vsel %vm726, %v1033, 0.0
        %1035 = vadd.xlane.f32.xlu0 %v1034
        %v1036 = vpop.xlane.xlu0 %1035
        %v1037 = vld [vmem:[#allocation3] sm:$0xf]
        %v1038 = vld [vmem:[#allocation3 + $0x4] sm:$0xf]
        %v1039 = vpack.c.bf16 %v1033, %v1033
        %v1042 = vunpack.c.l.b16 %v1037
        %v1043 = vunpack.c.l.b16 %v1038
        %v1044 = vpack.c.b16 %v1043, %v1042
        %1045 = vrot.lane.b32.xlu0 %v1044, 96
        %v1046 = vpop.permute.xlu0 %1045
        %v1049 = vsel %vm726, %v1039, 0
        %1051 = vmatprep.subr.bf16.mxu0 0
        %1052 = vmatpush1.bf16.msra.mxu0 0
        %1053 = vmatprep.subr.bf16.mxu0 0
        %1054 = vmatpush1.bf16.msra.mxu0 0
        %1055 = vmatprep.subr.bf16.mxu0 0
        %1056 = vmatpush1.bf16.msra.mxu0 0
        %1057 = vmatprep.subr.bf16.mxu0 0
        %1058 = vmatpush1.bf16.msra.mxu0 0
        %1059 = vmatprep.subr.bf16.mxu0 0
        %1060 = vmatpush1.bf16.msra.mxu0 0
        %1061 = vmatprep.subr.bf16.mxu0 0
        %1062 = vmatpush1.bf16.msra.mxu0 0
        %1063 = vmatprep.subr.bf16.mxu0 0
        %1064 = vmatpush1.bf16.msra.mxu0 0
        %1065 = vmatprep.subr.bf16.mxu0 0
        %1066 = vmatpush1.bf16.msra.mxu0 %v1046
        %1067 = vmatprep.subr.bf16.mxu0 0
        %1068 = vmatpush2.bf16.msra.mxu0 0
        %1069 = vmatprep.subr.bf16.mxu0 0
        %1070 = vmatpush2.bf16.msra.mxu0 0
        %1071 = vmatprep.subr.bf16.mxu0 0
        %1072 = vmatpush2.bf16.msra.mxu0 0
        %1073 = vmatprep.subr.bf16.mxu0 0
        %1074 = vmatpush2.bf16.msra.mxu0 0
        %1075 = vmatprep.subr.bf16.mxu0 0
        %1076 = vmatpush2.bf16.msra.mxu0 0
        %1077 = vmatprep.subr.bf16.mxu0 0
        %1078 = vmatpush2.bf16.msra.mxu0 0
        %1079 = vmatprep.subr.bf16.mxu0 0
        %1080 = vmatpush2.bf16.msra.mxu0 0
        %1081 = vmatprep.subr.bf16.mxu0 0
        %1082 = vmatpush2.bf16.msra.mxu0 0
        %1083 = vmatprep.mubr.bf16.mxu0 0
        %1084 = vmatmul.mubr.bf16.gmra.mxu0 %v1049
        %v1085 = vpop.f32.mrf.mxu0
        %v1086 = vadd.f32 0.0, %v1085
        %v1087 = vpop.f32.mrf.mxu0
        %v1088 = vpop.f32.mrf.mxu0
        %v1089 = vpop.f32.mrf.mxu0
        %1090 = vdwg.mxu0
        %v1091 = vrcp.pop %v1036
        %v1092 = vmul.f32 %v1086, %v1091
        %v1093 = vpack.c.bf16 %v1092, %v1092
        %v1095 = vunpack.c.l.b16 %v1093
        %v1096 = vpack.c.b16 %v1095, %v1095
        %1097 = vrot.lane.b32.xlu0 %v1096, 32
        %v1098 = vpop.permute.xlu0 %1097
        %vm1100 = vcmask 388352
        %1101 = vst.msk [vmem:[#allocation4] sm:$0xf] %vm1100, %v1098
        %v1102 = vld [vmem:[#allocation2] sm:$0xf]
        %v1103 = vld [vmem:[#allocation2 + $0x4] sm:$0xf]
        %1104 = vrot.lane.b32.xlu0 %v718, 80
        %v1105 = vpop.permute.xlu0 %1104
        %v1108 = vunpack.c.l.b16 %v1102
        %v1109 = vunpack.c.l.b16 %v1103
        %v1110 = vpack.c.b16 %v1109, %v1108
        %1111 = vrot.lane.b32.xlu0 %v1110, 80
        %v1112 = vpop.permute.xlu0 %1111
        %v1114 = vsel %vm726, %v1105, 0
        %v1117 = vsel %vm726, %v1112, 0
        %1119 = vmatprep.subr.bf16.mxu0 0
        %1120 = vmatpush1.bf16.xpose.msra.mxu0 0
        %1121 = vmatprep.subr.bf16.mxu0 0
        %1122 = vmatpush1.bf16.xpose.msra.mxu0 0
        %1123 = vmatprep.subr.bf16.mxu0 0
        %1124 = vmatpush1.bf16.xpose.msra.mxu0 0
        %1125 = vmatprep.subr.bf16.mxu0 0
        %1126 = vmatpush1.bf16.xpose.msra.mxu0 0
        %1127 = vmatprep.subr.bf16.mxu0 0
        %1128 = vmatpush1.bf16.xpose.msra.mxu0 0
        %1129 = vmatprep.subr.bf16.mxu0 0
        %1130 = vmatpush1.bf16.xpose.msra.mxu0 0
        %1131 = vmatprep.subr.bf16.mxu0 0
        %1132 = vmatpush1.bf16.xpose.msra.mxu0 0
        %1133 = vmatprep.subr.bf16.mxu0 0
        %1134 = vmatpush1.bf16.xpose.msra.mxu0 %v1117
        %1135 = vmatprep.subr.bf16.mxu0 0
        %1136 = vmatpush2.bf16.xpose.msra.mxu0 0
        %1137 = vmatprep.subr.bf16.mxu0 0
        %1138 = vmatpush2.bf16.xpose.msra.mxu0 0
        %1139 = vmatprep.subr.bf16.mxu0 0
        %1140 = vmatpush2.bf16.xpose.msra.mxu0 0
        %1141 = vmatprep.subr.bf16.mxu0 0
        %1142 = vmatpush2.bf16.xpose.msra.mxu0 0
        %1143 = vmatprep.subr.bf16.mxu0 0
        %1144 = vmatpush2.bf16.xpose.msra.mxu0 0
        %1145 = vmatprep.subr.bf16.mxu0 0
        %1146 = vmatpush2.bf16.xpose.msra.mxu0 0
        %1147 = vmatprep.subr.bf16.mxu0 0
        %1148 = vmatpush2.bf16.xpose.msra.mxu0 0
        %1149 = vmatprep.subr.bf16.mxu0 0
        %1150 = vmatpush2.bf16.xpose.msra.mxu0 0
        %1151 = vmatprep.mubr.bf16.mxu0 0
        %1152 = vmatmul.mubr.bf16.gmra.mxu0 %v1114
        %v1153 = vpop.f32.mrf.mxu0
        %v1154 = vadd.f32 0.0, %v1153
        %v1155 = vpop.f32.mrf.mxu0
        %v1156 = vpop.f32.mrf.mxu0
        %v1157 = vpop.f32.mrf.mxu0
        %1158 = vdwg.mxu0
        %v1159 = vsel %vm726, %v1154, -inf
        %1160 = vmax.xlane.f32.xlu0 %v1159
        %v1161 = vpop.xlane.xlu0 %1160
        %v1162 = vsub.f32 %v1154, %v1161
        %v1163 = vmul.f32 %v1162, 1.442695
        %v1164 = vpow.pop %v1163
        %v1165 = vsel %vm726, %v1164, 0.0
        %1166 = vadd.xlane.f32.xlu0 %v1165
        %v1167 = vpop.xlane.xlu0 %1166
        %v1168 = vld [vmem:[#allocation3] sm:$0xf]
        %v1169 = vld [vmem:[#allocation3 + $0x4] sm:$0xf]
        %v1170 = vpack.c.bf16 %v1164, %v1164
        %v1173 = vunpack.c.l.b16 %v1168
        %v1174 = vunpack.c.l.b16 %v1169
        %v1175 = vpack.c.b16 %v1174, %v1173
        %1176 = vrot.lane.b32.xlu0 %v1175, 80
        %v1177 = vpop.permute.xlu0 %1176
        %v1180 = vsel %vm726, %v1170, 0
        %1182 = vmatprep.subr.bf16.mxu0 0
        %1183 = vmatpush1.bf16.msra.mxu0 0
        %1184 = vmatprep.subr.bf16.mxu0 0
        %1185 = vmatpush1.bf16.msra.mxu0 0
        %1186 = vmatprep.subr.bf16.mxu0 0
        %1187 = vmatpush1.bf16.msra.mxu0 0
        %1188 = vmatprep.subr.bf16.mxu0 0
        %1189 = vmatpush1.bf16.msra.mxu0 0
        %1190 = vmatprep.subr.bf16.mxu0 0
        %1191 = vmatpush1.bf16.msra.mxu0 0
        %1192 = vmatprep.subr.bf16.mxu0 0
        %1193 = vmatpush1.bf16.msra.mxu0 0
        %1194 = vmatprep.subr.bf16.mxu0 0
        %1195 = vmatpush1.bf16.msra.mxu0 0
        %1196 = vmatprep.subr.bf16.mxu0 0
        %1197 = vmatpush1.bf16.msra.mxu0 %v1177
        %1198 = vmatprep.subr.bf16.mxu0 0
        %1199 = vmatpush2.bf16.msra.mxu0 0
        %1200 = vmatprep.subr.bf16.mxu0 0
        %1201 = vmatpush2.bf16.msra.mxu0 0
        %1202 = vmatprep.subr.bf16.mxu0 0
        %1203 = vmatpush2.bf16.msra.mxu0 0
        %1204 = vmatprep.subr.bf16.mxu0 0
        %1205 = vmatpush2.bf16.msra.mxu0 0
        %1206 = vmatprep.subr.bf16.mxu0 0
        %1207 = vmatpush2.bf16.msra.mxu0 0
        %1208 = vmatprep.subr.bf16.mxu0 0
        %1209 = vmatpush2.bf16.msra.mxu0 0
        %1210 = vmatprep.subr.bf16.mxu0 0
        %1211 = vmatpush2.bf16.msra.mxu0 0
        %1212 = vmatprep.subr.bf16.mxu0 0
        %1213 = vmatpush2.bf16.msra.mxu0 0
        %1214 = vmatprep.mubr.bf16.mxu0 0
        %1215 = vmatmul.mubr.bf16.gmra.mxu0 %v1180
        %v1216 = vpop.f32.mrf.mxu0
        %v1217 = vadd.f32 0.0, %v1216
        %v1218 = vpop.f32.mrf.mxu0
        %v1219 = vpop.f32.mrf.mxu0
        %v1220 = vpop.f32.mrf.mxu0
        %1221 = vdwg.mxu0
        %v1222 = vrcp.pop %v1167
        %v1223 = vmul.f32 %v1217, %v1222
        %v1224 = vpack.c.bf16 %v1223, %v1223
        %v1226 = vunpack.c.l.b16 %v1224
        %v1227 = vpack.c.b16 %v1226, %v1226
        %1228 = vrot.lane.b32.xlu0 %v1227, 48
        %v1229 = vpop.permute.xlu0 %1228
        %vm1231 = vcmask 519552
        %1232 = vst.msk [vmem:[#allocation4] sm:$0xf] %vm1231, %v1229
        %v1233 = vld [vmem:[#allocation4] sm:$0xf]
        %v1234 = vld [vmem:[#allocation16] sm:$0xf]
        %v1235 = vld [vmem:[#allocation16 + $0x4] sm:$0xf]
        %v1236 = vld [vmem:[#allocation16 + $0x8] sm:$0xf]
        %v1237 = vld [vmem:[#allocation16 + $0xc] sm:$0xf]
        %v1238 = vld [vmem:[#allocation16 + $0x10] sm:$0xf]
        %v1239 = vld [vmem:[#allocation16 + $0x14] sm:$0xf]
        %v1240 = vld [vmem:[#allocation16 + $0x18] sm:$0xf]
        %v1241 = vld [vmem:[#allocation16 + $0x1c] sm:$0xf]
        %v1250 = vunpack.c.l.b16 %v1234
        %v1251 = vunpack.c.l.b16 %v1235
        %v1252 = vunpack.c.l.b16 %v1236
        %v1253 = vunpack.c.l.b16 %v1237
        %v1254 = vunpack.c.l.b16 %v1238
        %v1255 = vunpack.c.l.b16 %v1239
        %v1256 = vunpack.c.l.b16 %v1240
        %v1257 = vunpack.c.l.b16 %v1241
        %v1258 = vpack.c.b16 %v1251, %v1250
        %v1259 = vpack.c.b16 %v1253, %v1252
        %v1260 = vpack.c.b16 %v1255, %v1254
        %v1261 = vpack.c.b16 %v1257, %v1256
        %v1267 = vsel %vm673, %v1233, 0
        %1269 = vmatprep.subr.bf16.mxu0 0
        %1270 = vmatpush1.bf16.msra.mxu0 0
        %1271 = vmatprep.subr.bf16.mxu0 0
        %1272 = vmatpush1.bf16.msra.mxu0 0
        %1273 = vmatprep.subr.bf16.mxu0 0
        %1274 = vmatpush1.bf16.msra.mxu0 0
        %1275 = vmatprep.subr.bf16.mxu0 0
        %1276 = vmatpush1.bf16.msra.mxu0 0
        %1277 = vmatprep.subr.bf16.mxu0 0
        %1278 = vmatpush1.bf16.msra.mxu0 %v1261
        %1279 = vmatprep.subr.bf16.mxu0 0
        %1280 = vmatpush1.bf16.msra.mxu0 %v1260
        %1281 = vmatprep.subr.bf16.mxu0 0
        %1282 = vmatpush1.bf16.msra.mxu0 %v1259
        %1283 = vmatprep.subr.bf16.mxu0 0
        %1284 = vmatpush1.bf16.msra.mxu0 %v1258
        %1285 = vmatprep.subr.bf16.mxu0 0
        %1286 = vmatpush2.bf16.msra.mxu0 0
        %1287 = vmatprep.subr.bf16.mxu0 0
        %1288 = vmatpush2.bf16.msra.mxu0 0
        %1289 = vmatprep.subr.bf16.mxu0 0
        %1290 = vmatpush2.bf16.msra.mxu0 0
        %1291 = vmatprep.subr.bf16.mxu0 0
        %1292 = vmatpush2.bf16.msra.mxu0 0
        %1293 = vmatprep.subr.bf16.mxu0 0
        %1294 = vmatpush2.bf16.msra.mxu0 0
        %1295 = vmatprep.subr.bf16.mxu0 0
        %1296 = vmatpush2.bf16.msra.mxu0 0
        %1297 = vmatprep.subr.bf16.mxu0 0
        %1298 = vmatpush2.bf16.msra.mxu0 0
        %1299 = vmatprep.subr.bf16.mxu0 0
        %1300 = vmatpush2.bf16.msra.mxu0 0
        %1301 = vmatprep.mubr.bf16.mxu0 0
        %1302 = vmatmul.mubr.bf16.gmra.mxu0 %v1267
        %v1303 = vpop.f32.mrf.mxu0
        %v1304 = vadd.f32 0.0, %v1303
        %v1305 = vpop.f32.mrf.mxu0
        %v1306 = vpop.f32.mrf.mxu0
        %v1307 = vpop.f32.mrf.mxu0
        %1308 = vdwg.mxu0
        %1309 = vst.msk [vmem:[%s446] sm:$0xff] %vm673, %v1304
        %s1310 = sand.u32 %s215, 1
        %s1311 = scalar_lea.sflag [#allocation7], %s1310
        %s1312 = sand.u32 %s215, 1
        %s1313 = smul.addr %s1312, 8
        %s1314 = scalar_lea.vmem [#allocation17], %s1313
        // Predicated region
        $region81: #{tpu_custom_call.1} parent=47 // pred_check
          %p1315 = pneg %p225
        $region82: #{tpu_custom_call.1} parent=47 // pred_check_branch
          %1317 = sbr.rel (%p1315) target = $region84
        $region83: #{tpu_custom_call.1} parent=47 // pred_region
          %s1319 = ssub.s32 128, 128
          %1320 = vsyncadd %s1311, %s1319
          %s1321 = smul.addr %s33, 2
          %s1322 = sadd.s32 %s34, %s1321
          %s1323 = smul.addr %s1322, 128
          %s1324 = scalar_lea.hbm %s7, %s1323
          %s1326 = sshll.u32 %s1314, 4
          %s1327 = int_to_ptr.vmem [resolvable:$true] %s1326
          %1329 = dma.vmem_to_hbm [thread:$0]  %s1327, 128, %s1324, %s1311
        $region84: #{tpu_custom_call.1} parent=47 // pred_fallthru
          _
      $region48: #{tpu_custom_call.1} parent=5 // pred_fallthru
        _
      %p1330 = scmp.le.s32.totalorder 2, %s24
      // Predicated region
      $region85: #{tpu_custom_call.1} parent=5 // pred_check
        %p1331 = pneg %p1330
      $region86: #{tpu_custom_call.1} parent=5 // pred_check_branch
        %1333 = sbr.rel (%p1331) target = $region88
      $region87: #{tpu_custom_call.1} parent=5 // pred_region
        %s1334 = ssub.s32 %s24, 2
        // Predicated region
        $region89: #{tpu_custom_call.1} parent=87 // pred_check
          %p1335 = pneg %p231
        $region90: #{tpu_custom_call.1} parent=87 // pred_check_branch
          %1337 = sbr.rel (%p1335) target = $region92
        $region91: #{tpu_custom_call.1} parent=87 // pred_region
          %s1338 = sand.u32 %s216, 1
          %s1339 = scalar_lea.sflag [#allocation7], %s1338
          %s1340 = sand.u32 %s216, 1
          %s1341 = smul.addr %s1340, 8
          %s1342 = scalar_lea.vmem [#allocation17], %s1341
          %1343 = dma.done %s1339, 128
        $region92: #{tpu_custom_call.1} parent=87 // pred_fallthru
          _
      $region88: #{tpu_custom_call.1} parent=5 // pred_fallthru
        _
    $region6: #{tpu_custom_call.1} parent=1 // loop_footer
      %s28 = sadd.s32 1, %s24
    $region7: #{tpu_custom_call.1} parent=1 // loop_footer_branch
      %23 = sbr.rel target = $region3
    $region8: #{tpu_custom_call.1} parent=1 // loop_exit
      _
    %1344 = vsyncpa [#allocation6], 1
    %s1345 = scalar_lea.sflag [#allocation6], 1
    %1346 = vsyncpa %s1345, 1
    %1347 = vsyncpa [#allocation9], 1
    %s1348 = scalar_lea.sflag [#allocation9], 1
    %1349 = vsyncpa %s1348, 1
    %1350 = vsyncpa [#allocation12], 1
    %1351 = vsyncpa [#allocation15], 1
    %1352 = vsyncpa [#allocation7], 1
    %s1353 = scalar_lea.sflag [#allocation7], 1
    %1354 = vsyncpa %s1353, 1

</llo_original>
